<compile_context>
chip_gen: v6e
topology: v6e:2x2x1
jax: 0.10.0
libtpu: 0.0.40
codegen_flags: <defaults>
</compile_context>

<pallas_src>
import jax
import jax.numpy as jnp
from jax.experimental import pallas as pl
from jax.experimental.pallas import tpu as pltpu


# ----------------------------- in-kernel helpers -----------------------------

def _gelu_tanh(v):
    # tanh-approx GELU: one EUP tanh + a few VALU ops (vs. 10+ VALU ops for the
    # erf rational polynomial).  ~1e-3 abs deviation from exact erf-GELU.
    c = 0.7978845608028654  # sqrt(2/pi)
    return 0.5 * v * (1.0 + jnp.tanh(c * (v + 0.044715 * v * v * v)))


def _layernorm(v, w, b, eps=1e-5):
    # Single-pass: E[x] and E[x^2] together; var = E[x^2] - mean^2.
    mu = jnp.mean(v, axis=-1, keepdims=True)
    ex2 = jnp.mean(v * v, axis=-1, keepdims=True)
    var = ex2 - mu * mu
    return (v - mu) * jax.lax.rsqrt(var + eps) * w + b


# --------------------------------- kernel ------------------------------------

def _make_kernel(BB, Np, D):
    bf16 = jnp.bfloat16
    f32 = jnp.float32

    def kernel(patches_ref, pos_ref, projw_ref, f1w_ref, f2w_ref, pww_ref,
               vecs_ref, rowp_ref, sel_ref, out_ref, z_scratch):
        # ---- unpack packed parameter slabs ----
        vecs = vecs_ref[...]                       # (12, D) f32
        projb = vecs[0:1, :]
        n1w, n1b = vecs[1:2, :], vecs[2:3, :]
        n2w, n2b = vecs[3:4, :], vecs[4:5, :]
        f1b, f2b = vecs[5:6, :], vecs[6:7, :]
        nfw, nfb = vecs[7:8, :], vecs[8:9, :]
        hb = vecs[9:10, 0:1]                       # head bias scalar, (1, 1)
        mask_lo = vecs[10:11, :]                   # 0 at feature 0, else 1
        mask_hi = vecs[11:12, :]                   # 0 at feature D-1, else 1

        rowp = rowp_ref[...]                       # (R, 5) per-(batch,patch) params
        dw0, dw1, dw2 = rowp[:, 0:1], rowp[:, 1:2], rowp[:, 2:3]
        dwb, pwb = rowp[:, 3:4], rowp[:, 4:5]

        # ---- PatchEmbed: Conv1d(1, D, k=P, stride=P) == one wide bf16 matmul ----
        x = jnp.dot(patches_ref[...], projw_ref[...],
                    preferred_element_type=f32) + projb            # (R, D) f32
        x = x + pos_ref[...]                 # pos_embed; pos_drop = identity

        # ---- Block, token-mixer branch: LN -> DeepWiseSeparableConv ----
        h = _layernorm(x, n1w, n1b)                                 # (R, D)
        # zero-padded +/-1 shifts along the feature (lane) axis via XLU rotates,
        # edge handling via precomputed (1, D) masks (no per-step iota/compares).
        h_m1 = mask_lo * pltpu.roll(h, shift=1, axis=1)             # h[:, l-1]
        h_p1 = mask_hi * pltpu.roll(h, shift=D - 1, axis=1)         # h[:, l+1]
        y = dw0 * h_m1 + dw1 * h + dw2 * h_p1 + dwb                 # depthwise k=3

        # pointwise Conv1d(N, N, k=1): BB small (Np,Np)x(Np,D) bf16 matmuls over
        # 8-sublane-aligned batch segments (replaces the 87.5%-zero block-diag
        # kron(I_BB, pww) weight).  Statically unrolled; results land in scratch.
        y_bf = y.astype(bf16)
        pww = pww_ref[...]                                          # (Np, Np) bf16
        for b in range(BB):
            seg = jnp.dot(pww, y_bf[b * Np:(b + 1) * Np, :],
                          preferred_element_type=f32)               # (Np, D)
            z_scratch[b * Np:(b + 1) * Np, :] = seg
        x = x + (z_scratch[...] + pwb)            # drop_path = identity (rate 0)

        # ---- Block, MLP branch: LN -> fc1 -> GELU -> fc2 (bf16 MXU operands) ----
        h2 = _layernorm(x, n2w, n2b)
        m = jnp.dot(h2.astype(bf16), f1w_ref[...],
                    preferred_element_type=f32) + f1b
        m = _gelu_tanh(m)
        m = jnp.dot(m.astype(bf16), f2w_ref[...],
                    preferred_element_type=f32) + f2b
        x = x + m

        # ---- final LayerNorm, MaxPool1d(kernel=D) over features, head Linear(N->1) ----
        xf = _layernorm(x, nfw, nfb)                                # (R, D)
        pooled = jnp.max(xf, axis=-1, keepdims=True)                # (R, 1)
        # head as a VPU multiply + sublane reduce against a selector with hw
        # folded in (zero rows on padded patches) -> lane-dense (1, BB) block.
        # TODO(synk): past BB~32 replace with a (BB,R)x(R,1) matvec / segment sum
        # to keep the selector O(BB*N) instead of O(BB^2*N).
        out_row = jnp.sum(sel_ref[...] * pooled, axis=0, keepdims=True) + hb
        out_ref[...] = out_row.reshape(1, 1, BB)

    return kernel


# -------------------------------- wrapper -------------------------------------

def dscformer_forward(x, params, *, patch_size=60, block_batch=32):
    f32, bf16 = jnp.float32, jnp.bfloat16
    B, C, L = x.shape
    assert C == 1
    P = patch_size
    N = L // P                                # num_patches (= 70 for defaults)
    assert N * P == L
    D = params["projw"].shape[1]              # num_features (= 60)
    H = params["f1w"].shape[1]                # mlp hidden (= D for mlp_ratio=1.0)
    assert H == D, "param packing assumes mlp_ratio=1.0 (DSCformer default)"

    Np = ((N + 7) // 8) * 8                   # pad 70 -> 72: 8-sublane aligned segments
    if B <= block_batch:
        BB = B                                # small batch: one block == whole batch
    else:
        BB = int(block_batch)
        assert BB % 8 == 0, "block_batch must be a multiple of 8 when B > block_batch"
    B_pad = ((B + BB - 1) // BB) * BB
    G = B_pad // BB                           # grid steps; on v7x prefer G >= 2
    R = BB * Np                               # rows per block (always multiple of 8)

    # ---- glue reshapes / parameter packing (all outside the kernel) ----
    xp = x.astype(f32)
    if B_pad != B:
        xp = jnp.pad(xp, ((0, B_pad - B), (0, 0), (0, 0)))
    patches = xp.reshape(B_pad, N, P)
    patches = jnp.pad(patches, ((0, 0), (0, Np - N), (0, 0)))       # zero patch rows
    patches = patches.reshape(B_pad * Np, P).astype(bf16)           # streamed, bf16

    def pad_n(a):                                                   # (N, k) -> (Np, k)
        return jnp.pad(a.astype(f32), ((0, Np - N), (0, 0)))

    pos_t = jnp.tile(pad_n(params["pos"]), (BB, 1))                 # (R, D)
    rowp = jnp.tile(jnp.concatenate(
        [pad_n(params["dww"]), pad_n(params["dwb"]), pad_n(params["pwb"])],
        axis=1), (BB, 1))                                           # (R, 5)
    pww_p = jnp.pad(params["pww"].astype(f32),
                    ((0, Np - N), (0, Np - N))).astype(bf16)        # (Np, Np) bf16
    hw_p = pad_n(params["hw"].reshape(N, 1))                        # (Np, 1), 0 on pads
    sel = jnp.kron(jnp.eye(BB, dtype=f32), hw_p)                    # (R, BB) selector

    col = jnp.arange(D, dtype=f32)
    mask_lo = jnp.where(col == 0, 0.0, 1.0).reshape(1, D)
    mask_hi = jnp.where(col == D - 1, 0.0, 1.0).reshape(1, D)
    hb_row = jnp.pad(params["hb"].reshape(1, 1).astype(f32), ((0, 0), (0, D - 1)))
    vecs = jnp.concatenate(
        [params["projb"], params["n1w"], params["n1b"], params["n2w"],
         params["n2b"], params["f1b"], params["f2b"], params["nfw"],
         params["nfb"], hb_row, mask_lo, mask_hi], axis=0).astype(f32)  # (12, D)

    # TODO(synk): constant-index inputs below could be single-buffered
    # (pipeline_mode=pl.Buffered(1)) to save a few MiB of VMEM at larger BB.
    in_specs = [
        pl.BlockSpec((R, P), lambda g: (g, 0)),       # patches (only streamed input)
        pl.BlockSpec((R, D), lambda g: (0, 0)),       # pos embed (tiled)
        pl.BlockSpec((P, D), lambda g: (0, 0)),       # patch-embed proj weight (bf16)
        pl.BlockSpec((D, H), lambda g: (0, 0)),       # mlp fc1 weight (bf16)
        pl.BlockSpec((H, D), lambda g: (0, 0)),       # mlp fc2 weight (bf16)
        pl.BlockSpec((Np, Np), lambda g: (0, 0)),     # pointwise conv weight (bf16)
        pl.BlockSpec((12, D), lambda g: (0, 0)),      # packed bias / norm / mask rows
        pl.BlockSpec((R, 5), lambda g: (0, 0)),       # packed per-row dw/pw params
        pl.BlockSpec((R, BB), lambda g: (0, 0)),      # head selector (hw folded in)
    ]
    out_specs = pl.BlockSpec((1, 1, BB), lambda g: (g, 0, 0))

    # advisory cost estimate for the XLA scheduler
    flops_step = (2 * R * P * D + 2 * BB * Np * Np * D + 4 * R * D * H
                  + 2 * R * BB + 30 * R * D)
    trans_step = R * H
    bytes_total = (2 * B_pad * Np * P
                   + 4 * (R * D + R * 5 + R * BB + 12 * D + B_pad)
                   + 2 * (P * D + 2 * D * H + Np * Np))
    cost = pl.CostEstimate(flops=int(flops_step * G),
                           transcendentals=int(trans_step * G),
                           bytes_accessed=int(bytes_total))

    out3 = pl.pallas_call(
        _make_kernel(BB, Np, D),
        out_shape=jax.ShapeDtypeStruct((G, 1, BB), f32),
        grid=(G,),
        in_specs=in_specs,
        out_specs=out_specs,
        scratch_shapes=[pltpu.VMEM((R, D), f32)],     # pointwise-conv output slab
        compiler_params=pltpu.CompilerParams(
            dimension_semantics=("parallel",),
            vmem_limit_bytes=40 * 1024 * 1024),
        cost_estimate=cost,
    )(patches, pos_t, params["projw"].astype(bf16), params["f1w"].astype(bf16),
      params["f2w"].astype(bf16), pww_p, vecs, rowp, sel)

    return out3.reshape(B_pad, 1)[:B]


def init_params(key, *, L=4200, patch_size=60, D=60):
    # Deterministic synthetic weights; shapes follow DSCformer.__init__ defaults
    # (mlp_ratio=1.0 -> hidden == D, p_divide=1, depth=1, token_mixer='dsc').
    # NOTE layout convention: projw is (P, D) and f1w/f2w are (in, out) — real
    # PyTorch checkpoints (Conv1d (D,1,P), Linear (out,in)) must be transposed
    # when packed into this dict.
    N = L // patch_size
    H = D
    f = jnp.float32
    ks = jax.random.split(key, 12)

    def rnd(k, shape, scale=0.02):
        return (scale * jax.random.normal(k, shape)).astype(f)

    return dict(
        projw=rnd(ks[0], (patch_size, D)),   # Conv1d(1, D, k=P) weight as (k, out)
        projb=rnd(ks[1], (1, D)),
        pos=jnp.zeros((N, D), f),            # nn.Parameter(torch.zeros(1, N, D))
        n1w=jnp.ones((1, D), f), n1b=jnp.zeros((1, D), f),
        dww=rnd(ks[2], (N, 3)), dwb=rnd(ks[3], (N, 1)),       # depthwise conv
        pww=rnd(ks[4], (N, N)), pwb=rnd(ks[5], (N, 1)),       # pointwise conv
        n2w=jnp.ones((1, D), f), n2b=jnp.zeros((1, D), f),
        f1w=rnd(ks[6], (D, H)), f1b=rnd(ks[7], (1, H)),       # fc1 (in, out) layout
        f2w=rnd(ks[8], (H, D)), f2b=rnd(ks[9], (1, D)),       # fc2 (in, out) layout
        nfw=jnp.ones((1, D), f), nfb=jnp.zeros((1, D), f),
        hw=rnd(ks[10], (1, N)), hb=rnd(ks[11], (1, 1)),       # head Linear(N, 1)
    )


if __name__ == "__main__":
    key = jax.random.PRNGKey(0)
    kx, kp = jax.random.split(key)
    B, L = 2, 4200                            # module hard-codes input_shape=4200
    x = jax.random.normal(kx, (B, 1, L), dtype=jnp.float32)
    params = init_params(kp, L=L, patch_size=60, D=60)
    out = dscformer_forward(x, params, patch_size=60, block_batch=32)
    jax.block_until_ready(out)
    assert out.shape == (B, 1) and out.dtype == jnp.float32
    assert bool(jnp.all(jnp.isfinite(out)))
    print("KERNEL_OK")
</pallas_src>

<mosaic_0001>
module attributes {stable_mosaic.version = 11 : i64} {
  func.func @kernel(%arg0: i32, %arg1: memref<144x60xbf16, #tpu.memory_space<vmem>>, %arg2: memref<144x60xf32, #tpu.memory_space<vmem>>, %arg3: memref<60x60xbf16, #tpu.memory_space<vmem>>, %arg4: memref<60x60xbf16, #tpu.memory_space<vmem>>, %arg5: memref<60x60xbf16, #tpu.memory_space<vmem>>, %arg6: memref<72x72xbf16, #tpu.memory_space<vmem>>, %arg7: memref<12x60xf32, #tpu.memory_space<vmem>>, %arg8: memref<144x5xf32, #tpu.memory_space<vmem>>, %arg9: memref<144x2xf32, #tpu.memory_space<vmem>>, %arg10: memref<1x1x2xf32, #tpu.memory_space<vmem>>, %arg11: memref<144x60xf32, #tpu.memory_space<vmem>>) attributes {dimension_semantics = [#tpu.dimension_semantics<parallel>], iteration_bounds = array<i64: 1>, scalar_prefetch = 0 : i64, scratch_operands = 1 : i64, tpu.core_type = #tpu.core_type<tc>, window_params = [{transform_indices = @transform_0, window_bounds = array<i64: 144, 60>}, {pipeline_mode = #tpu.pipeline_mode<synchronous>, transform_indices = @transform_1, window_bounds = array<i64: 144, 60>}, {pipeline_mode = #tpu.pipeline_mode<synchronous>, transform_indices = @transform_2, window_bounds = array<i64: 60, 60>}, {pipeline_mode = #tpu.pipeline_mode<synchronous>, transform_indices = @transform_3, window_bounds = array<i64: 60, 60>}, {pipeline_mode = #tpu.pipeline_mode<synchronous>, transform_indices = @transform_4, window_bounds = array<i64: 60, 60>}, {pipeline_mode = #tpu.pipeline_mode<synchronous>, transform_indices = @transform_5, window_bounds = array<i64: 72, 72>}, {pipeline_mode = #tpu.pipeline_mode<synchronous>, transform_indices = @transform_6, window_bounds = array<i64: 12, 60>}, {pipeline_mode = #tpu.pipeline_mode<synchronous>, transform_indices = @transform_7, window_bounds = array<i64: 144, 5>}, {pipeline_mode = #tpu.pipeline_mode<synchronous>, transform_indices = @transform_8, window_bounds = array<i64: 144, 2>}, {transform_indices = @transform_9, window_bounds = array<i64: 1, 1, 2>}]} {
    %c0 = arith.constant 0 : index
    %c0_0 = arith.constant 0 : index
    %0 = vector.load %arg7[%c0, %c0_0] : memref<12x60xf32, #tpu.memory_space<vmem>>, vector<12x60xf32>
    %1 = vector.extract_strided_slice %0 {offsets = [0, 0], sizes = [1, 60], strides = [1, 1]} : vector<12x60xf32> to vector<1x60xf32>
    %2 = vector.extract_strided_slice %0 {offsets = [1, 0], sizes = [1, 60], strides = [1, 1]} : vector<12x60xf32> to vector<1x60xf32>
    %3 = vector.extract_strided_slice %0 {offsets = [2, 0], sizes = [1, 60], strides = [1, 1]} : vector<12x60xf32> to vector<1x60xf32>
    %4 = vector.extract_strided_slice %0 {offsets = [3, 0], sizes = [1, 60], strides = [1, 1]} : vector<12x60xf32> to vector<1x60xf32>
    %5 = vector.extract_strided_slice %0 {offsets = [4, 0], sizes = [1, 60], strides = [1, 1]} : vector<12x60xf32> to vector<1x60xf32>
    %6 = vector.extract_strided_slice %0 {offsets = [5, 0], sizes = [1, 60], strides = [1, 1]} : vector<12x60xf32> to vector<1x60xf32>
    %7 = vector.extract_strided_slice %0 {offsets = [6, 0], sizes = [1, 60], strides = [1, 1]} : vector<12x60xf32> to vector<1x60xf32>
    %8 = vector.extract_strided_slice %0 {offsets = [7, 0], sizes = [1, 60], strides = [1, 1]} : vector<12x60xf32> to vector<1x60xf32>
    %9 = vector.extract_strided_slice %0 {offsets = [8, 0], sizes = [1, 60], strides = [1, 1]} : vector<12x60xf32> to vector<1x60xf32>
    %10 = vector.extract_strided_slice %0 {offsets = [9, 0], sizes = [1, 1], strides = [1, 1]} : vector<12x60xf32> to vector<1x1xf32>
    %11 = vector.extract_strided_slice %0 {offsets = [10, 0], sizes = [1, 60], strides = [1, 1]} : vector<12x60xf32> to vector<1x60xf32>
    %12 = vector.extract_strided_slice %0 {offsets = [11, 0], sizes = [1, 60], strides = [1, 1]} : vector<12x60xf32> to vector<1x60xf32>
    %c0_1 = arith.constant 0 : index
    %c0_2 = arith.constant 0 : index
    %13 = vector.load %arg8[%c0_1, %c0_2] : memref<144x5xf32, #tpu.memory_space<vmem>>, vector<144x5xf32>
    %14 = vector.extract_strided_slice %13 {offsets = [0, 0], sizes = [144, 1], strides = [1, 1]} : vector<144x5xf32> to vector<144x1xf32>
    %15 = vector.extract_strided_slice %13 {offsets = [0, 1], sizes = [144, 1], strides = [1, 1]} : vector<144x5xf32> to vector<144x1xf32>
    %16 = vector.extract_strided_slice %13 {offsets = [0, 2], sizes = [144, 1], strides = [1, 1]} : vector<144x5xf32> to vector<144x1xf32>
    %17 = vector.extract_strided_slice %13 {offsets = [0, 3], sizes = [144, 1], strides = [1, 1]} : vector<144x5xf32> to vector<144x1xf32>
    %18 = vector.extract_strided_slice %13 {offsets = [0, 4], sizes = [144, 1], strides = [1, 1]} : vector<144x5xf32> to vector<144x1xf32>
    %c0_3 = arith.constant 0 : index
    %c0_4 = arith.constant 0 : index
    %19 = vector.load %arg1[%c0_3, %c0_4] : memref<144x60xbf16, #tpu.memory_space<vmem>>, vector<144x60xbf16>
    %c0_5 = arith.constant 0 : index
    %c0_6 = arith.constant 0 : index
    %20 = vector.load %arg3[%c0_5, %c0_6] : memref<60x60xbf16, #tpu.memory_space<vmem>>, vector<60x60xbf16>
    %cst = arith.constant dense<0.000000e+00> : vector<144x60xf32>
    %21 = tpu.matmul %19, %20, %cst {dimension_numbers = #tpu.dot_dimension_numbers<[1], [0], [0], [1], [0, 0, 1, 1], [], []>} : vector<144x60xbf16>, vector<60x60xbf16>, vector<144x60xf32> -> vector<144x60xf32>
    %22 = vector.broadcast %1 : vector<1x60xf32> to vector<144x60xf32>
    %23 = arith.addf %21, %22 : vector<144x60xf32>
    %c0_7 = arith.constant 0 : index
    %c0_8 = arith.constant 0 : index
    %24 = vector.load %arg2[%c0_7, %c0_8] : memref<144x60xf32, #tpu.memory_space<vmem>>, vector<144x60xf32>
    %25 = arith.addf %23, %24 : vector<144x60xf32>
    %cst_9 = arith.constant dense<0.000000e+00> : vector<144xf32>
    %26 = vector.multi_reduction <add>, %25, %cst_9 [1] : vector<144x60xf32> to vector<144xf32>
    %27 = vector.shape_cast %26 : vector<144xf32> to vector<144x1xf32>
    %cst_10 = arith.constant 6.000000e+01 : f32
    %28 = vector.broadcast %cst_10 : f32 to vector<144x1xf32>
    %29 = arith.divf %27, %28 : vector<144x1xf32>
    %30 = arith.mulf %25, %25 : vector<144x60xf32>
    %cst_11 = arith.constant dense<0.000000e+00> : vector<144xf32>
    %31 = vector.multi_reduction <add>, %30, %cst_11 [1] : vector<144x60xf32> to vector<144xf32>
    %32 = vector.shape_cast %31 : vector<144xf32> to vector<144x1xf32>
    %cst_12 = arith.constant 6.000000e+01 : f32
    %33 = vector.broadcast %cst_12 : f32 to vector<144x1xf32>
    %34 = arith.divf %32, %33 : vector<144x1xf32>
    %35 = arith.mulf %29, %29 : vector<144x1xf32>
    %36 = arith.subf %34, %35 : vector<144x1xf32>
    %37 = vector.broadcast %29 : vector<144x1xf32> to vector<144x60xf32>
    %38 = arith.subf %25, %37 : vector<144x60xf32>
    %cst_13 = arith.constant 9.99999974E-6 : f32
    %39 = vector.broadcast %cst_13 : f32 to vector<144x1xf32>
    %40 = arith.addf %36, %39 : vector<144x1xf32>
    %41 = math.rsqrt %40 : vector<144x1xf32>
    %42 = vector.broadcast %41 : vector<144x1xf32> to vector<144x60xf32>
    %43 = arith.mulf %38, %42 : vector<144x60xf32>
    %44 = vector.broadcast %2 : vector<1x60xf32> to vector<144x60xf32>
    %45 = arith.mulf %43, %44 : vector<144x60xf32>
    %46 = vector.broadcast %3 : vector<1x60xf32> to vector<144x60xf32>
    %47 = arith.addf %45, %46 : vector<144x60xf32>
    %c1_i32 = arith.constant 1 : i32
    %48 = tpu.dynamic_rotate %47 by %c1_i32 dim 1 : vector<144x60xf32>, i32 -> vector<144x60xf32>
    %49 = vector.broadcast %11 : vector<1x60xf32> to vector<144x60xf32>
    %50 = arith.mulf %49, %48 : vector<144x60xf32>
    %c59_i32 = arith.constant 59 : i32
    %51 = tpu.dynamic_rotate %47 by %c59_i32 dim 1 : vector<144x60xf32>, i32 -> vector<144x60xf32>
    %52 = vector.broadcast %12 : vector<1x60xf32> to vector<144x60xf32>
    %53 = arith.mulf %52, %51 : vector<144x60xf32>
    %54 = vector.broadcast %14 : vector<144x1xf32> to vector<144x60xf32>
    %55 = arith.mulf %54, %50 : vector<144x60xf32>
    %56 = vector.broadcast %15 : vector<144x1xf32> to vector<144x60xf32>
    %57 = arith.mulf %56, %47 : vector<144x60xf32>
    %58 = arith.addf %55, %57 : vector<144x60xf32>
    %59 = vector.broadcast %16 : vector<144x1xf32> to vector<144x60xf32>
    %60 = arith.mulf %59, %53 : vector<144x60xf32>
    %61 = arith.addf %58, %60 : vector<144x60xf32>
    %62 = vector.broadcast %17 : vector<144x1xf32> to vector<144x60xf32>
    %63 = arith.addf %61, %62 : vector<144x60xf32>
    %64 = arith.truncf %63 : vector<144x60xf32> to vector<144x60xbf16>
    %c0_14 = arith.constant 0 : index
    %c0_15 = arith.constant 0 : index
    %65 = vector.load %arg6[%c0_14, %c0_15] : memref<72x72xbf16, #tpu.memory_space<vmem>>, vector<72x72xbf16>
    %66 = vector.extract_strided_slice %64 {offsets = [0, 0], sizes = [72, 60], strides = [1, 1]} : vector<144x60xbf16> to vector<72x60xbf16>
    %cst_16 = arith.constant dense<0.000000e+00> : vector<72x60xf32>
    %67 = tpu.matmul %65, %66, %cst_16 {dimension_numbers = #tpu.dot_dimension_numbers<[1], [0], [0], [1], [0, 0, 1, 1], [], []>} : vector<72x72xbf16>, vector<72x60xbf16>, vector<72x60xf32> -> vector<72x60xf32>
    %c0_17 = arith.constant 0 : index
    %c0_18 = arith.constant 0 : index
    %68 = vector.load %arg11[%c0_17, %c0_18] : memref<144x60xf32, #tpu.memory_space<vmem>>, vector<72x60xf32>
    tpu.vector_store %arg11[%c0_17, %c0_18], %67 {strides = array<i32>} : memref<144x60xf32, #tpu.memory_space<vmem>>, vector<72x60xf32>,
    %69 = vector.extract_strided_slice %64 {offsets = [72, 0], sizes = [72, 60], strides = [1, 1]} : vector<144x60xbf16> to vector<72x60xbf16>
    %cst_19 = arith.constant dense<0.000000e+00> : vector<72x60xf32>
    %70 = tpu.matmul %65, %69, %cst_19 {dimension_numbers = #tpu.dot_dimension_numbers<[1], [0], [0], [1], [0, 0, 1, 1], [], []>} : vector<72x72xbf16>, vector<72x60xbf16>, vector<72x60xf32> -> vector<72x60xf32>
    %c72 = arith.constant 72 : index
    %c0_20 = arith.constant 0 : index
    %71 = vector.load %arg11[%c72, %c0_20] : memref<144x60xf32, #tpu.memory_space<vmem>>, vector<72x60xf32>
    tpu.vector_store %arg11[%c72, %c0_20], %70 {strides = array<i32>} : memref<144x60xf32, #tpu.memory_space<vmem>>, vector<72x60xf32>,
    %c0_21 = arith.constant 0 : index
    %c0_22 = arith.constant 0 : index
    %72 = vector.load %arg11[%c0_21, %c0_22] : memref<144x60xf32, #tpu.memory_space<vmem>>, vector<144x60xf32>
    %73 = vector.broadcast %18 : vector<144x1xf32> to vector<144x60xf32>
    %74 = arith.addf %72, %73 : vector<144x60xf32>
    %75 = arith.addf %25, %74 : vector<144x60xf32>
    %cst_23 = arith.constant dense<0.000000e+00> : vector<144xf32>
    %76 = vector.multi_reduction <add>, %75, %cst_23 [1] : vector<144x60xf32> to vector<144xf32>
    %77 = vector.shape_cast %76 : vector<144xf32> to vector<144x1xf32>
    %cst_24 = arith.constant 6.000000e+01 : f32
    %78 = vector.broadcast %cst_24 : f32 to vector<144x1xf32>
    %79 = arith.divf %77, %78 : vector<144x1xf32>
    %80 = arith.mulf %75, %75 : vector<144x60xf32>
    %cst_25 = arith.constant dense<0.000000e+00> : vector<144xf32>
    %81 = vector.multi_reduction <add>, %80, %cst_25 [1] : vector<144x60xf32> to vector<144xf32>
    %82 = vector.shape_cast %81 : vector<144xf32> to vector<144x1xf32>
    %cst_26 = arith.constant 6.000000e+01 : f32
    %83 = vector.broadcast %cst_26 : f32 to vector<144x1xf32>
    %84 = arith.divf %82, %83 : vector<144x1xf32>
    %85 = arith.mulf %79, %79 : vector<144x1xf32>
    %86 = arith.subf %84, %85 : vector<144x1xf32>
    %87 = vector.broadcast %79 : vector<144x1xf32> to vector<144x60xf32>
    %88 = arith.subf %75, %87 : vector<144x60xf32>
    %cst_27 = arith.constant 9.99999974E-6 : f32
    %89 = vector.broadcast %cst_27 : f32 to vector<144x1xf32>
    %90 = arith.addf %86, %89 : vector<144x1xf32>
    %91 = math.rsqrt %90 : vector<144x1xf32>
    %92 = vector.broadcast %91 : vector<144x1xf32> to vector<144x60xf32>
    %93 = arith.mulf %88, %92 : vector<144x60xf32>
    %94 = vector.broadcast %4 : vector<1x60xf32> to vector<144x60xf32>
    %95 = arith.mulf %93, %94 : vector<144x60xf32>
    %96 = vector.broadcast %5 : vector<1x60xf32> to vector<144x60xf32>
    %97 = arith.addf %95, %96 : vector<144x60xf32>
    %98 = arith.truncf %97 : vector<144x60xf32> to vector<144x60xbf16>
    %c0_28 = arith.constant 0 : index
    %c0_29 = arith.constant 0 : index
    %99 = vector.load %arg4[%c0_28, %c0_29] : memref<60x60xbf16, #tpu.memory_space<vmem>>, vector<60x60xbf16>
    %cst_30 = arith.constant dense<0.000000e+00> : vector<144x60xf32>
    %100 = tpu.matmul %98, %99, %cst_30 {dimension_numbers = #tpu.dot_dimension_numbers<[1], [0], [0], [1], [0, 0, 1, 1], [], []>} : vector<144x60xbf16>, vector<60x60xbf16>, vector<144x60xf32> -> vector<144x60xf32>
    %101 = vector.broadcast %6 : vector<1x60xf32> to vector<144x60xf32>
    %102 = arith.addf %100, %101 : vector<144x60xf32>
    %cst_31 = arith.constant 5.000000e-01 : f32
    %103 = vector.broadcast %cst_31 : f32 to vector<144x60xf32>
    %104 = arith.mulf %103, %102 : vector<144x60xf32>
    %cst_32 = arith.constant 4.471500e-02 : f32
    %105 = vector.broadcast %cst_32 : f32 to vector<144x60xf32>
    %106 = arith.mulf %105, %102 : vector<144x60xf32>
    %107 = arith.mulf %106, %102 : vector<144x60xf32>
    %108 = arith.mulf %107, %102 : vector<144x60xf32>
    %109 = arith.addf %102, %108 : vector<144x60xf32>
    %cst_33 = arith.constant 0.797884583 : f32
    %110 = vector.broadcast %cst_33 : f32 to vector<144x60xf32>
    %111 = arith.mulf %110, %109 : vector<144x60xf32>
    %112 = math.tanh %111 : vector<144x60xf32>
    %cst_34 = arith.constant 1.000000e+00 : f32
    %113 = vector.broadcast %cst_34 : f32 to vector<144x60xf32>
    %114 = arith.addf %113, %112 : vector<144x60xf32>
    %115 = arith.mulf %104, %114 : vector<144x60xf32>
    %116 = arith.truncf %115 : vector<144x60xf32> to vector<144x60xbf16>
    %c0_35 = arith.constant 0 : index
    %c0_36 = arith.constant 0 : index
    %117 = vector.load %arg5[%c0_35, %c0_36] : memref<60x60xbf16, #tpu.memory_space<vmem>>, vector<60x60xbf16>
    %cst_37 = arith.constant dense<0.000000e+00> : vector<144x60xf32>
    %118 = tpu.matmul %116, %117, %cst_37 {dimension_numbers = #tpu.dot_dimension_numbers<[1], [0], [0], [1], [0, 0, 1, 1], [], []>} : vector<144x60xbf16>, vector<60x60xbf16>, vector<144x60xf32> -> vector<144x60xf32>
    %119 = vector.broadcast %7 : vector<1x60xf32> to vector<144x60xf32>
    %120 = arith.addf %118, %119 : vector<144x60xf32>
    %121 = arith.addf %75, %120 : vector<144x60xf32>
    %cst_38 = arith.constant dense<0.000000e+00> : vector<144xf32>
    %122 = vector.multi_reduction <add>, %121, %cst_38 [1] : vector<144x60xf32> to vector<144xf32>
    %123 = vector.shape_cast %122 : vector<144xf32> to vector<144x1xf32>
    %cst_39 = arith.constant 6.000000e+01 : f32
    %124 = vector.broadcast %cst_39 : f32 to vector<144x1xf32>
    %125 = arith.divf %123, %124 : vector<144x1xf32>
    %126 = arith.mulf %121, %121 : vector<144x60xf32>
    %cst_40 = arith.constant dense<0.000000e+00> : vector<144xf32>
    %127 = vector.multi_reduction <add>, %126, %cst_40 [1] : vector<144x60xf32> to vector<144xf32>
    %128 = vector.shape_cast %127 : vector<144xf32> to vector<144x1xf32>
    %cst_41 = arith.constant 6.000000e+01 : f32
    %129 = vector.broadcast %cst_41 : f32 to vector<144x1xf32>
    %130 = arith.divf %128, %129 : vector<144x1xf32>
    %131 = arith.mulf %125, %125 : vector<144x1xf32>
    %132 = arith.subf %130, %131 : vector<144x1xf32>
    %133 = vector.broadcast %125 : vector<144x1xf32> to vector<144x60xf32>
    %134 = arith.subf %121, %133 : vector<144x60xf32>
    %cst_42 = arith.constant 9.99999974E-6 : f32
    %135 = vector.broadcast %cst_42 : f32 to vector<144x1xf32>
    %136 = arith.addf %132, %135 : vector<144x1xf32>
    %137 = math.rsqrt %136 : vector<144x1xf32>
    %138 = vector.broadcast %137 : vector<144x1xf32> to vector<144x60xf32>
    %139 = arith.mulf %134, %138 : vector<144x60xf32>
    %140 = vector.broadcast %8 : vector<1x60xf32> to vector<144x60xf32>
    %141 = arith.mulf %139, %140 : vector<144x60xf32>
    %142 = vector.broadcast %9 : vector<1x60xf32> to vector<144x60xf32>
    %143 = arith.addf %141, %142 : vector<144x60xf32>
    %cst_43 = arith.constant dense<0xFF800000> : vector<144xf32>
    %144 = vector.multi_reduction <maximumf>, %143, %cst_43 [1] : vector<144x60xf32> to vector<144xf32>
    %145 = vector.shape_cast %144 : vector<144xf32> to vector<144x1xf32>
    %c0_44 = arith.constant 0 : index
    %c0_45 = arith.constant 0 : index
    %146 = vector.load %arg9[%c0_44, %c0_45] : memref<144x2xf32, #tpu.memory_space<vmem>>, vector<144x2xf32>
    %147 = vector.broadcast %145 : vector<144x1xf32> to vector<144x2xf32>
    %148 = arith.mulf %146, %147 : vector<144x2xf32>
    %cst_46 = arith.constant dense<0.000000e+00> : vector<2xf32>
    %149 = vector.multi_reduction <add>, %148, %cst_46 [0] : vector<144x2xf32> to vector<2xf32>
    %150 = vector.shape_cast %149 : vector<2xf32> to vector<1x2xf32>
    %151 = vector.broadcast %10 : vector<1x1xf32> to vector<1x2xf32>
    %152 = arith.addf %150, %151 : vector<1x2xf32>
    %153 = vector.shape_cast %152 : vector<1x2xf32> to vector<1x1x2xf32>
    %c0_47 = arith.constant 0 : index
    %c0_48 = arith.constant 0 : index
    %c0_49 = arith.constant 0 : index
    %154 = vector.load %arg10[%c0_47, %c0_48, %c0_49] : memref<1x1x2xf32, #tpu.memory_space<vmem>>, vector<1x1x2xf32>
    tpu.vector_store %arg10[%c0_47, %c0_48, %c0_49], %153 {strides = array<i32>} : memref<1x1x2xf32, #tpu.memory_space<vmem>>, vector<1x1x2xf32>,
    return
  }
  func.func @transform_0(%arg0: i32) -> (i32, i32) {
    %c0_i32 = arith.constant 0 : i32
    %c0_i32_0 = arith.constant 0 : i32
    return %arg0, %c0_i32 : i32, i32
  }
  func.func @transform_1(%arg0: i32) -> (i32, i32) {
    %c0_i32 = arith.constant 0 : i32
    %c0_i32_0 = arith.constant 0 : i32
    %c0_i32_1 = arith.constant 0 : i32
    return %c0_i32, %c0_i32_0 : i32, i32
  }
  func.func @transform_2(%arg0: i32) -> (i32, i32) {
    %c0_i32 = arith.constant 0 : i32
    %c0_i32_0 = arith.constant 0 : i32
    %c0_i32_1 = arith.constant 0 : i32
    return %c0_i32, %c0_i32_0 : i32, i32
  }
  func.func @transform_3(%arg0: i32) -> (i32, i32) {
    %c0_i32 = arith.constant 0 : i32
    %c0_i32_0 = arith.constant 0 : i32
    %c0_i32_1 = arith.constant 0 : i32
    return %c0_i32, %c0_i32_0 : i32, i32
  }
  func.func @transform_4(%arg0: i32) -> (i32, i32) {
    %c0_i32 = arith.constant 0 : i32
    %c0_i32_0 = arith.constant 0 : i32
    %c0_i32_1 = arith.constant 0 : i32
    return %c0_i32, %c0_i32_0 : i32, i32
  }
  func.func @transform_5(%arg0: i32) -> (i32, i32) {
    %c0_i32 = arith.constant 0 : i32
    %c0_i32_0 = arith.constant 0 : i32
    %c0_i32_1 = arith.constant 0 : i32
    return %c0_i32, %c0_i32_0 : i32, i32
  }
  func.func @transform_6(%arg0: i32) -> (i32, i32) {
    %c0_i32 = arith.constant 0 : i32
    %c0_i32_0 = arith.constant 0 : i32
    %c0_i32_1 = arith.constant 0 : i32
    return %c0_i32, %c0_i32_0 : i32, i32
  }
  func.func @transform_7(%arg0: i32) -> (i32, i32) {
    %c0_i32 = arith.constant 0 : i32
    %c0_i32_0 = arith.constant 0 : i32
    %c0_i32_1 = arith.constant 0 : i32
    return %c0_i32, %c0_i32_0 : i32, i32
  }
  func.func @transform_8(%arg0: i32) -> (i32, i32) {
    %c0_i32 = arith.constant 0 : i32
    %c0_i32_0 = arith.constant 0 : i32
    %c0_i32_1 = arith.constant 0 : i32
    return %c0_i32, %c0_i32_0 : i32, i32
  }
  func.func @transform_9(%arg0: i32) -> (i32, i32, i32) {
    %c0_i32 = arith.constant 0 : i32
    %c0_i32_0 = arith.constant 0 : i32
    %c0_i32_1 = arith.constant 0 : i32
    return %arg0, %c0_i32, %c0_i32_0 : i32, i32, i32
  }
}

</mosaic_0001>

<llo_original>
// kernel: tpu_custom_call.1
$region0: #{tpu_custom_call.1}
  #allocation0 [shape = 'u32[]', space=smem, size = 0x4, offset = 0x4, fixed_abs, tag = 'smem constant byte address 0x4 - core index']
  #allocation1 [shape = 'u32[144,128]{1,0:T(1,128)}', space=vmem, size = 0x12000, scoped, tag = 'internal scratch']
  #allocation2 [shape = 'f32[144,60]{1,0:T(8,128)}', space=vmem, size = 0x12000, scoped, tag = 'scratch operand']
  %s0 = inlined_call_operand.vmem [shape: bf16[144,60], index: 0, kind: input, shape index: {}]
  %s1 = inlined_call_operand.vmem [shape: f32[144,60], index: 1, kind: input, shape index: {}]
  %s2 = inlined_call_operand.vmem [shape: bf16[60,60], index: 2, kind: input, shape index: {}]
  %s3 = inlined_call_operand.vmem [shape: bf16[60,60], index: 3, kind: input, shape index: {}]
  %s4 = inlined_call_operand.vmem [shape: bf16[60,60], index: 4, kind: input, shape index: {}]
  %s5 = inlined_call_operand.vmem [shape: bf16[72,72], index: 5, kind: input, shape index: {}]
  %s6 = inlined_call_operand.vmem [shape: f32[12,60], index: 6, kind: input, shape index: {}]
  %s7 = inlined_call_operand.vmem [shape: f32[144,5], index: 7, kind: input, shape index: {}]
  %s8 = inlined_call_operand.vmem [shape: f32[144,2], index: 8, kind: input, shape index: {}]
  %s9 = inlined_call_operand.hbm [shape: f32[1,1,2], index: 9, kind: output, shape index: {}]
  %s10 = sld [smem:[#allocation0]]
  $region46: #{tpu_custom_call.1} parent=0
    _
  %s12 = ssub.s32 1, %s10
  %s13 = scalar_select 0, %s12, %s10
  $region1: #{tpu_custom_call.1} parent=0
    #allocation3 [shape = 'u8[512]{0}', space=vmem, size = 0x400, scoped, tag = 'output window, operand 0, single buffered']
    #allocation4 [shape = 's32[1]{0}', space=sflag, size = 0x4, scoped, tag = 'scoped memory for tpu_custom_call.1']
    %14 = vsyncpa [#allocation4], 0
    // Predicated region
    $region2: #{tpu_custom_call.1} parent=1 // pred_check
      _
    $region3: #{tpu_custom_call.1} parent=1 // pred_check_branch
      %16 = sbr.rel (0) target = $region5
    $region4: #{tpu_custom_call.1} parent=1 // pred_region
      _
    $region5: #{tpu_custom_call.1} parent=1 // pred_fallthru
      _
    // Predicated region
    $region6: #{tpu_custom_call.1} parent=1 // pred_check
      _
    $region7: #{tpu_custom_call.1} parent=1 // pred_check_branch
      %18 = sbr.rel (0) target = $region9
    $region8: #{tpu_custom_call.1} parent=1 // pred_region
      _
    $region9: #{tpu_custom_call.1} parent=1 // pred_fallthru
      _
    // Predicated region
    $region10: #{tpu_custom_call.1} parent=1 // pred_check
      _
    $region11: #{tpu_custom_call.1} parent=1 // pred_check_branch
      %20 = sbr.rel (0) target = $region13
    $region12: #{tpu_custom_call.1} parent=1 // pred_region
      _
    $region13: #{tpu_custom_call.1} parent=1 // pred_fallthru
      _
    // Predicated region
    $region14: #{tpu_custom_call.1} parent=1 // pred_check
      _
    $region15: #{tpu_custom_call.1} parent=1 // pred_check_branch
      %22 = sbr.rel (0) target = $region17
    $region16: #{tpu_custom_call.1} parent=1 // pred_region
      _
    $region17: #{tpu_custom_call.1} parent=1 // pred_fallthru
      _
    // Predicated region
    $region18: #{tpu_custom_call.1} parent=1 // pred_check
      _
    $region19: #{tpu_custom_call.1} parent=1 // pred_check_branch
      %24 = sbr.rel (0) target = $region21
    $region20: #{tpu_custom_call.1} parent=1 // pred_region
      _
    $region21: #{tpu_custom_call.1} parent=1 // pred_fallthru
      _
    // Predicated region
    $region22: #{tpu_custom_call.1} parent=1 // pred_check
      _
    $region23: #{tpu_custom_call.1} parent=1 // pred_check_branch
      %26 = sbr.rel (0) target = $region25
    $region24: #{tpu_custom_call.1} parent=1 // pred_region
      _
    $region25: #{tpu_custom_call.1} parent=1 // pred_fallthru
      _
    // Predicated region
    $region26: #{tpu_custom_call.1} parent=1 // pred_check
      _
    $region27: #{tpu_custom_call.1} parent=1 // pred_check_branch
      %28 = sbr.rel (0) target = $region29
    $region28: #{tpu_custom_call.1} parent=1 // pred_region
      _
    $region29: #{tpu_custom_call.1} parent=1 // pred_fallthru
      _
    // Predicated region
    $region30: #{tpu_custom_call.1} parent=1 // pred_check
      _
    $region31: #{tpu_custom_call.1} parent=1 // pred_check_branch
      %30 = sbr.rel (0) target = $region33
    $region32: #{tpu_custom_call.1} parent=1 // pred_region
      _
    $region33: #{tpu_custom_call.1} parent=1 // pred_fallthru
      _
    // Predicated region
    $region34: #{tpu_custom_call.1} parent=1 // pred_check
      _
    $region35: #{tpu_custom_call.1} parent=1 // pred_check_branch
      %32 = sbr.rel (0) target = $region37
    $region36: #{tpu_custom_call.1} parent=1 // pred_region
      _
    $region37: #{tpu_custom_call.1} parent=1 // pred_fallthru
      _
    %v34 = vld [vmem:[%s6] sm:$0xff]
    %v35 = vld [vmem:[%s6 + $0x8] sm:$0xf]
    %v36 = vld [vmem:[%s7] sm:$0xff]
    %v37 = vld [vmem:[%s7 + $0x8] sm:$0xff]
    %v38 = vld [vmem:[%s7 + $0x10] sm:$0xff]
    %v39 = vld [vmem:[%s7 + $0x18] sm:$0xff]
    %v40 = vld [vmem:[%s7 + $0x20] sm:$0xff]
    %v41 = vld [vmem:[%s7 + $0x28] sm:$0xff]
    %v42 = vld [vmem:[%s7 + $0x30] sm:$0xff]
    %v43 = vld [vmem:[%s7 + $0x38] sm:$0xff]
    %v44 = vld [vmem:[%s7 + $0x40] sm:$0xff]
    %v45 = vld [vmem:[%s7 + $0x48] sm:$0xff]
    %v46 = vld [vmem:[%s7 + $0x50] sm:$0xff]
    %v47 = vld [vmem:[%s7 + $0x58] sm:$0xff]
    %v48 = vld [vmem:[%s7 + $0x60] sm:$0xff]
    %v49 = vld [vmem:[%s7 + $0x68] sm:$0xff]
    %v50 = vld [vmem:[%s7 + $0x70] sm:$0xff]
    %v51 = vld [vmem:[%s7 + $0x78] sm:$0xff]
    %v52 = vld [vmem:[%s7 + $0x80] sm:$0xff]
    %v53 = vld [vmem:[%s7 + $0x88] sm:$0xff]
    %v54 = vld [vmem:[%s0] sm:$0xf]
    %v55 = vld [vmem:[%s0 + $0x4] sm:$0xf]
    %v56 = vld [vmem:[%s0 + $0x8] sm:$0xf]
    %v57 = vld [vmem:[%s0 + $0xc] sm:$0xf]
    %v58 = vld [vmem:[%s0 + $0x10] sm:$0xf]
    %v59 = vld [vmem:[%s0 + $0x14] sm:$0xf]
    %v60 = vld [vmem:[%s0 + $0x18] sm:$0xf]
    %v61 = vld [vmem:[%s0 + $0x1c] sm:$0xf]
    %v62 = vld [vmem:[%s0 + $0x20] sm:$0xf]
    %v63 = vld [vmem:[%s0 + $0x24] sm:$0xf]
    %v64 = vld [vmem:[%s0 + $0x28] sm:$0xf]
    %v65 = vld [vmem:[%s0 + $0x2c] sm:$0xf]
    %v66 = vld [vmem:[%s0 + $0x30] sm:$0xf]
    %v67 = vld [vmem:[%s0 + $0x34] sm:$0xf]
    %v68 = vld [vmem:[%s0 + $0x38] sm:$0xf]
    %v69 = vld [vmem:[%s0 + $0x3c] sm:$0xf]
    %v70 = vld [vmem:[%s0 + $0x40] sm:$0xf]
    %v71 = vld [vmem:[%s0 + $0x44] sm:$0xf]
    %v72 = vld [vmem:[%s2] sm:$0xf]
    %v73 = vld [vmem:[%s2 + $0x4] sm:$0xf]
    %v74 = vld [vmem:[%s2 + $0x8] sm:$0xf]
    %v75 = vld [vmem:[%s2 + $0xc] sm:$0xf]
    %v76 = vld [vmem:[%s2 + $0x10] sm:$0xf]
    %v77 = vld [vmem:[%s2 + $0x14] sm:$0xf]
    %v78 = vld [vmem:[%s2 + $0x18] sm:$0xf]
    %v79 = vld [vmem:[%s2 + $0x1c] sm:$0x3]
    %v80 = vlaneseq
    %v81 = vshrl.u32 %v80, 7
    %v82 = vsub.s32 0, %v81
    %v83 = vrot.slane %v34, %v82
    %v102 = vunpack.c.l.b16 %v54
    %v103 = vunpack.c.l.b16 %v55
    %v104 = vunpack.c.l.b16 %v56
    %v105 = vunpack.c.l.b16 %v57
    %v106 = vunpack.c.l.b16 %v58
    %v107 = vunpack.c.l.b16 %v59
    %v108 = vunpack.c.l.b16 %v60
    %v109 = vunpack.c.l.b16 %v61
    %v110 = vunpack.c.l.b16 %v62
    %v111 = vunpack.c.l.b16 %v63
    %v112 = vunpack.c.l.b16 %v64
    %v113 = vunpack.c.l.b16 %v65
    %v114 = vunpack.c.l.b16 %v66
    %v115 = vunpack.c.l.b16 %v67
    %v116 = vunpack.c.l.b16 %v68
    %v117 = vunpack.c.l.b16 %v69
    %v118 = vunpack.c.l.b16 %v70
    %v119 = vunpack.c.l.b16 %v71
    %v120 = vpack.c.b16 %v103, %v102
    %v121 = vpack.c.b16 %v105, %v104
    %v122 = vpack.c.b16 %v107, %v106
    %v123 = vpack.c.b16 %v109, %v108
    %v124 = vpack.c.b16 %v111, %v110
    %v125 = vpack.c.b16 %v113, %v112
    %v126 = vpack.c.b16 %v115, %v114
    %v127 = vpack.c.b16 %v117, %v116
    %v128 = vpack.c.b16 %v119, %v118
    %v137 = vunpack.c.l.b16 %v72
    %v138 = vunpack.c.l.b16 %v73
    %v139 = vunpack.c.l.b16 %v74
    %v140 = vunpack.c.l.b16 %v75
    %v141 = vunpack.c.l.b16 %v76
    %v142 = vunpack.c.l.b16 %v77
    %v143 = vunpack.c.l.b16 %v78
    %v144 = vunpack.c.l.b16 %v79
    %v145 = vpack.c.b16 %v138, %v137
    %v146 = vpack.c.b16 %v140, %v139
    %v147 = vpack.c.b16 %v142, %v141
    %v148 = vpack.c.b16 %v144, %v143
    %vm152 = vcmask 490496
    %v154 = vsel %vm152, %v120, 0
    %v157 = vsel %vm152, %v121, 0
    %v160 = vsel %vm152, %v122, 0
    %v163 = vsel %vm152, %v123, 0
    %v166 = vsel %vm152, %v124, 0
    %v169 = vsel %vm152, %v125, 0
    %v172 = vsel %vm152, %v126, 0
    %v175 = vsel %vm152, %v127, 0
    %v178 = vsel %vm152, %v128, 0
    %vm180 = vcmask 1045504
    %v182 = vsel %vm180, %v148, 0
    %184 = vmatprep.subr.bf16.mxu0 0
    %185 = vmatpush1.bf16.msra.mxu0 0
    %186 = vmatprep.subr.bf16.mxu0 0
    %187 = vmatpush1.bf16.msra.mxu0 0
    %188 = vmatprep.subr.bf16.mxu0 0
    %189 = vmatpush1.bf16.msra.mxu0 0
    %190 = vmatprep.subr.bf16.mxu0 0
    %191 = vmatpush1.bf16.msra.mxu0 0
    %192 = vmatprep.subr.bf16.mxu0 0
    %193 = vmatpush1.bf16.msra.mxu0 %v182
    %194 = vmatprep.subr.bf16.mxu0 0
    %195 = vmatpush1.bf16.msra.mxu0 %v147
    %196 = vmatprep.subr.bf16.mxu0 0
    %197 = vmatpush1.bf16.msra.mxu0 %v146
    %198 = vmatprep.subr.bf16.mxu0 0
    %199 = vmatpush1.bf16.msra.mxu0 %v145
    %200 = vmatprep.subr.bf16.mxu0 0
    %201 = vmatpush2.bf16.msra.mxu0 0
    %202 = vmatprep.subr.bf16.mxu0 0
    %203 = vmatpush2.bf16.msra.mxu0 0
    %204 = vmatprep.subr.bf16.mxu0 0
    %205 = vmatpush2.bf16.msra.mxu0 0
    %206 = vmatprep.subr.bf16.mxu0 0
    %207 = vmatpush2.bf16.msra.mxu0 0
    %208 = vmatprep.subr.bf16.mxu0 0
    %209 = vmatpush2.bf16.msra.mxu0 0
    %210 = vmatprep.subr.bf16.mxu0 0
    %211 = vmatpush2.bf16.msra.mxu0 0
    %212 = vmatprep.subr.bf16.mxu0 0
    %213 = vmatpush2.bf16.msra.mxu0 0
    %214 = vmatprep.subr.bf16.mxu0 0
    %215 = vmatpush2.bf16.msra.mxu0 0
    %216 = vmatprep.mubr.bf16.mxu0 0
    %217 = vmatmul.mubr.bf16.gmra.mxu0 %v154
    %v218 = vpop.f32.mrf.mxu0
    %v219 = vadd.f32 %v83, %v218
    %v220 = vpop.f32.mrf.mxu0
    %v221 = vpop.f32.mrf.mxu0
    %v222 = vadd.f32 %v83, %v221
    %v223 = vpop.f32.mrf.mxu0
    %224 = vmatprep.mubr.bf16.mxu0 0
    %225 = vmatmul.mubr.bf16.gmra.mxu0 %v157
    %v226 = vpop.f32.mrf.mxu0
    %v227 = vadd.f32 %v83, %v226
    %v228 = vpop.f32.mrf.mxu0
    %v229 = vpop.f32.mrf.mxu0
    %v230 = vadd.f32 %v83, %v229
    %v231 = vpop.f32.mrf.mxu0
    %232 = vmatprep.mubr.bf16.mxu0 0
    %233 = vmatmul.mubr.bf16.gmra.mxu0 %v160
    %v234 = vpop.f32.mrf.mxu0
    %v235 = vadd.f32 %v83, %v234
    %v236 = vpop.f32.mrf.mxu0
    %v237 = vpop.f32.mrf.mxu0
    %v238 = vadd.f32 %v83, %v237
    %v239 = vpop.f32.mrf.mxu0
    %240 = vmatprep.mubr.bf16.mxu0 0
    %241 = vmatmul.mubr.bf16.gmra.mxu0 %v163
    %v242 = vpop.f32.mrf.mxu0
    %v243 = vadd.f32 %v83, %v242
    %v244 = vpop.f32.mrf.mxu0
    %v245 = vpop.f32.mrf.mxu0
    %v246 = vadd.f32 %v83, %v245
    %v247 = vpop.f32.mrf.mxu0
    %248 = vmatprep.mubr.bf16.mxu0 0
    %249 = vmatmul.mubr.bf16.gmra.mxu0 %v166
    %v250 = vpop.f32.mrf.mxu0
    %v251 = vadd.f32 %v83, %v250
    %v252 = vpop.f32.mrf.mxu0
    %v253 = vpop.f32.mrf.mxu0
    %v254 = vadd.f32 %v83, %v253
    %v255 = vpop.f32.mrf.mxu0
    %256 = vmatprep.mubr.bf16.mxu0 0
    %257 = vmatmul.mubr.bf16.gmra.mxu0 %v169
    %v258 = vpop.f32.mrf.mxu0
    %v259 = vadd.f32 %v83, %v258
    %v260 = vpop.f32.mrf.mxu0
    %v261 = vpop.f32.mrf.mxu0
    %v262 = vadd.f32 %v83, %v261
    %v263 = vpop.f32.mrf.mxu0
    %264 = vmatprep.mubr.bf16.mxu0 0
    %265 = vmatmul.mubr.bf16.gmra.mxu0 %v172
    %v266 = vpop.f32.mrf.mxu0
    %v267 = vadd.f32 %v83, %v266
    %v268 = vpop.f32.mrf.mxu0
    %v269 = vpop.f32.mrf.mxu0
    %v270 = vadd.f32 %v83, %v269
    %v271 = vpop.f32.mrf.mxu0
    %272 = vmatprep.mubr.bf16.mxu0 0
    %273 = vmatmul.mubr.bf16.gmra.mxu0 %v175
    %v274 = vpop.f32.mrf.mxu0
    %v275 = vadd.f32 %v83, %v274
    %v276 = vpop.f32.mrf.mxu0
    %v277 = vpop.f32.mrf.mxu0
    %v278 = vadd.f32 %v83, %v277
    %v279 = vpop.f32.mrf.mxu0
    %280 = vmatprep.mubr.bf16.mxu0 0
    %281 = vmatmul.mubr.bf16.gmra.mxu0 %v178
    %v282 = vpop.f32.mrf.mxu0
    %v283 = vadd.f32 %v83, %v282
    %v284 = vpop.f32.mrf.mxu0
    %v285 = vpop.f32.mrf.mxu0
    %v286 = vadd.f32 %v83, %v285
    %v287 = vpop.f32.mrf.mxu0
    %288 = vdwg.mxu0
    %v289 = vld [vmem:[%s1] sm:$0xff]
    %v290 = vld [vmem:[%s1 + $0x8] sm:$0xff]
    %v291 = vld [vmem:[%s1 + $0x10] sm:$0xff]
    %v292 = vld [vmem:[%s1 + $0x18] sm:$0xff]
    %v293 = vld [vmem:[%s1 + $0x20] sm:$0xff]
    %v294 = vld [vmem:[%s1 + $0x28] sm:$0xff]
    %v295 = vld [vmem:[%s1 + $0x30] sm:$0xff]
    %v296 = vld [vmem:[%s1 + $0x38] sm:$0xff]
    %v297 = vld [vmem:[%s1 + $0x40] sm:$0xff]
    %v298 = vld [vmem:[%s1 + $0x48] sm:$0xff]
    %v299 = vld [vmem:[%s1 + $0x50] sm:$0xff]
    %v300 = vld [vmem:[%s1 + $0x58] sm:$0xff]
    %v301 = vld [vmem:[%s1 + $0x60] sm:$0xff]
    %v302 = vld [vmem:[%s1 + $0x68] sm:$0xff]
    %v303 = vld [vmem:[%s1 + $0x70] sm:$0xff]
    %v304 = vld [vmem:[%s1 + $0x78] sm:$0xff]
    %v305 = vld [vmem:[%s1 + $0x80] sm:$0xff]
    %v306 = vld [vmem:[%s1 + $0x88] sm:$0xff]
    %v307 = vadd.f32 %v219, %v289
    %v308 = vadd.f32 %v222, %v290
    %v309 = vadd.f32 %v227, %v291
    %v310 = vadd.f32 %v230, %v292
    %v311 = vadd.f32 %v235, %v293
    %v312 = vadd.f32 %v238, %v294
    %v313 = vadd.f32 %v243, %v295
    %v314 = vadd.f32 %v246, %v296
    %v315 = vadd.f32 %v251, %v297
    %v316 = vadd.f32 %v254, %v298
    %v317 = vadd.f32 %v259, %v299
    %v318 = vadd.f32 %v262, %v300
    %v319 = vadd.f32 %v267, %v301
    %v320 = vadd.f32 %v270, %v302
    %v321 = vadd.f32 %v275, %v303
    %v322 = vadd.f32 %v278, %v304
    %v323 = vadd.f32 %v283, %v305
    %v324 = vadd.f32 %v286, %v306
    %v325 = vsel %vm152, %v307, 0.0
    %326 = vadd.xlane.f32.xlu0 %v325
    %v327 = vpop.xlane.xlu0 %326
    %v328 = vsel %vm152, %v308, 0.0
    %329 = vadd.xlane.f32.xlu0 %v328
    %v330 = vpop.xlane.xlu0 %329
    %v331 = vsel %vm152, %v309, 0.0
    %332 = vadd.xlane.f32.xlu0 %v331
    %v333 = vpop.xlane.xlu0 %332
    %v334 = vsel %vm152, %v310, 0.0
    %335 = vadd.xlane.f32.xlu0 %v334
    %v336 = vpop.xlane.xlu0 %335
    %v337 = vsel %vm152, %v311, 0.0
    %338 = vadd.xlane.f32.xlu0 %v337
    %v339 = vpop.xlane.xlu0 %338
    %v340 = vsel %vm152, %v312, 0.0
    %341 = vadd.xlane.f32.xlu0 %v340
    %v342 = vpop.xlane.xlu0 %341
    %v343 = vsel %vm152, %v313, 0.0
    %344 = vadd.xlane.f32.xlu0 %v343
    %v345 = vpop.xlane.xlu0 %344
    %v346 = vsel %vm152, %v314, 0.0
    %347 = vadd.xlane.f32.xlu0 %v346
    %v348 = vpop.xlane.xlu0 %347
    %v349 = vsel %vm152, %v315, 0.0
    %350 = vadd.xlane.f32.xlu0 %v349
    %v351 = vpop.xlane.xlu0 %350
    %v352 = vsel %vm152, %v316, 0.0
    %353 = vadd.xlane.f32.xlu0 %v352
    %v354 = vpop.xlane.xlu0 %353
    %v355 = vsel %vm152, %v317, 0.0
    %356 = vadd.xlane.f32.xlu0 %v355
    %v357 = vpop.xlane.xlu0 %356
    %v358 = vsel %vm152, %v318, 0.0
    %359 = vadd.xlane.f32.xlu0 %v358
    %v360 = vpop.xlane.xlu0 %359
    %v361 = vsel %vm152, %v319, 0.0
    %362 = vadd.xlane.f32.xlu0 %v361
    %v363 = vpop.xlane.xlu0 %362
    %v364 = vsel %vm152, %v320, 0.0
    %365 = vadd.xlane.f32.xlu0 %v364
    %v366 = vpop.xlane.xlu0 %365
    %v367 = vsel %vm152, %v321, 0.0
    %368 = vadd.xlane.f32.xlu0 %v367
    %v369 = vpop.xlane.xlu0 %368
    %v370 = vsel %vm152, %v322, 0.0
    %371 = vadd.xlane.f32.xlu0 %v370
    %v372 = vpop.xlane.xlu0 %371
    %v373 = vsel %vm152, %v323, 0.0
    %374 = vadd.xlane.f32.xlu0 %v373
    %v375 = vpop.xlane.xlu0 %374
    %v376 = vsel %vm152, %v324, 0.0
    %377 = vadd.xlane.f32.xlu0 %v376
    %v378 = vpop.xlane.xlu0 %377
    %v379 = vrcp.pop 60.0
    %v380 = vmul.f32 %v327, %v379
    %v381 = vmul.f32 %v330, %v379
    %v382 = vmul.f32 %v333, %v379
    %v383 = vmul.f32 %v336, %v379
    %v384 = vmul.f32 %v339, %v379
    %v385 = vmul.f32 %v342, %v379
    %v386 = vmul.f32 %v345, %v379
    %v387 = vmul.f32 %v348, %v379
    %v388 = vmul.f32 %v351, %v379
    %v389 = vmul.f32 %v354, %v379
    %v390 = vmul.f32 %v357, %v379
    %v391 = vmul.f32 %v360, %v379
    %v392 = vmul.f32 %v363, %v379
    %v393 = vmul.f32 %v366, %v379
    %v394 = vmul.f32 %v369, %v379
    %v395 = vmul.f32 %v372, %v379
    %v396 = vmul.f32 %v375, %v379
    %v397 = vmul.f32 %v378, %v379
    %v398 = vmul.f32 %v307, %v307
    %v399 = vmul.f32 %v308, %v308
    %v400 = vmul.f32 %v309, %v309
    %v401 = vmul.f32 %v310, %v310
    %v402 = vmul.f32 %v311, %v311
    %v403 = vmul.f32 %v312, %v312
    %v404 = vmul.f32 %v313, %v313
    %v405 = vmul.f32 %v314, %v314
    %v406 = vmul.f32 %v315, %v315
    %v407 = vmul.f32 %v316, %v316
    %v408 = vmul.f32 %v317, %v317
    %v409 = vmul.f32 %v318, %v318
    %v410 = vmul.f32 %v319, %v319
    %v411 = vmul.f32 %v320, %v320
    %v412 = vmul.f32 %v321, %v321
    %v413 = vmul.f32 %v322, %v322
    %v414 = vmul.f32 %v323, %v323
    %v415 = vmul.f32 %v324, %v324
    %v416 = vsel %vm152, %v398, 0.0
    %417 = vadd.xlane.f32.xlu0 %v416
    %v418 = vpop.xlane.xlu0 %417
    %v419 = vsel %vm152, %v399, 0.0
    %420 = vadd.xlane.f32.xlu0 %v419
    %v421 = vpop.xlane.xlu0 %420
    %v422 = vsel %vm152, %v400, 0.0
    %423 = vadd.xlane.f32.xlu0 %v422
    %v424 = vpop.xlane.xlu0 %423
    %v425 = vsel %vm152, %v401, 0.0
    %426 = vadd.xlane.f32.xlu0 %v425
    %v427 = vpop.xlane.xlu0 %426
    %v428 = vsel %vm152, %v402, 0.0
    %429 = vadd.xlane.f32.xlu0 %v428
    %v430 = vpop.xlane.xlu0 %429
    %v431 = vsel %vm152, %v403, 0.0
    %432 = vadd.xlane.f32.xlu0 %v431
    %v433 = vpop.xlane.xlu0 %432
    %v434 = vsel %vm152, %v404, 0.0
    %435 = vadd.xlane.f32.xlu0 %v434
    %v436 = vpop.xlane.xlu0 %435
    %v437 = vsel %vm152, %v405, 0.0
    %438 = vadd.xlane.f32.xlu0 %v437
    %v439 = vpop.xlane.xlu0 %438
    %v440 = vsel %vm152, %v406, 0.0
    %441 = vadd.xlane.f32.xlu0 %v440
    %v442 = vpop.xlane.xlu0 %441
    %v443 = vsel %vm152, %v407, 0.0
    %444 = vadd.xlane.f32.xlu0 %v443
    %v445 = vpop.xlane.xlu0 %444
    %v446 = vsel %vm152, %v408, 0.0
    %447 = vadd.xlane.f32.xlu0 %v446
    %v448 = vpop.xlane.xlu0 %447
    %v449 = vsel %vm152, %v409, 0.0
    %450 = vadd.xlane.f32.xlu0 %v449
    %v451 = vpop.xlane.xlu0 %450
    %v452 = vsel %vm152, %v410, 0.0
    %453 = vadd.xlane.f32.xlu0 %v452
    %v454 = vpop.xlane.xlu0 %453
    %v455 = vsel %vm152, %v411, 0.0
    %456 = vadd.xlane.f32.xlu0 %v455
    %v457 = vpop.xlane.xlu0 %456
    %v458 = vsel %vm152, %v412, 0.0
    %459 = vadd.xlane.f32.xlu0 %v458
    %v460 = vpop.xlane.xlu0 %459
    %v461 = vsel %vm152, %v413, 0.0
    %462 = vadd.xlane.f32.xlu0 %v461
    %v463 = vpop.xlane.xlu0 %462
    %v464 = vsel %vm152, %v414, 0.0
    %465 = vadd.xlane.f32.xlu0 %v464
    %v466 = vpop.xlane.xlu0 %465
    %v467 = vsel %vm152, %v415, 0.0
    %468 = vadd.xlane.f32.xlu0 %v467
    %v469 = vpop.xlane.xlu0 %468
    %v470 = vmul.f32 %v418, %v379
    %v471 = vmul.f32 %v421, %v379
    %v472 = vmul.f32 %v424, %v379
    %v473 = vmul.f32 %v427, %v379
    %v474 = vmul.f32 %v430, %v379
    %v475 = vmul.f32 %v433, %v379
    %v476 = vmul.f32 %v436, %v379
    %v477 = vmul.f32 %v439, %v379
    %v478 = vmul.f32 %v442, %v379
    %v479 = vmul.f32 %v445, %v379
    %v480 = vmul.f32 %v448, %v379
    %v481 = vmul.f32 %v451, %v379
    %v482 = vmul.f32 %v454, %v379
    %v483 = vmul.f32 %v457, %v379
    %v484 = vmul.f32 %v460, %v379
    %v485 = vmul.f32 %v463, %v379
    %v486 = vmul.f32 %v466, %v379
    %v487 = vmul.f32 %v469, %v379
    %v488 = vmul.f32 %v380, %v380
    %v489 = vmul.f32 %v381, %v381
    %v490 = vmul.f32 %v382, %v382
    %v491 = vmul.f32 %v383, %v383
    %v492 = vmul.f32 %v384, %v384
    %v493 = vmul.f32 %v385, %v385
    %v494 = vmul.f32 %v386, %v386
    %v495 = vmul.f32 %v387, %v387
    %v496 = vmul.f32 %v388, %v388
    %v497 = vmul.f32 %v389, %v389
    %v498 = vmul.f32 %v390, %v390
    %v499 = vmul.f32 %v391, %v391
    %v500 = vmul.f32 %v392, %v392
    %v501 = vmul.f32 %v393, %v393
    %v502 = vmul.f32 %v394, %v394
    %v503 = vmul.f32 %v395, %v395
    %v504 = vmul.f32 %v396, %v396
    %v505 = vmul.f32 %v397, %v397
    %v506 = vsub.f32 %v470, %v488
    %v507 = vsub.f32 %v471, %v489
    %v508 = vsub.f32 %v472, %v490
    %v509 = vsub.f32 %v473, %v491
    %v510 = vsub.f32 %v474, %v492
    %v511 = vsub.f32 %v475, %v493
    %v512 = vsub.f32 %v476, %v494
    %v513 = vsub.f32 %v477, %v495
    %v514 = vsub.f32 %v478, %v496
    %v515 = vsub.f32 %v479, %v497
    %v516 = vsub.f32 %v480, %v498
    %v517 = vsub.f32 %v481, %v499
    %v518 = vsub.f32 %v482, %v500
    %v519 = vsub.f32 %v483, %v501
    %v520 = vsub.f32 %v484, %v502
    %v521 = vsub.f32 %v485, %v503
    %v522 = vsub.f32 %v486, %v504
    %v523 = vsub.f32 %v487, %v505
    %v524 = vsub.f32 %v307, %v380
    %v525 = vsub.f32 %v308, %v381
    %v526 = vsub.f32 %v309, %v382
    %v527 = vsub.f32 %v310, %v383
    %v528 = vsub.f32 %v311, %v384
    %v529 = vsub.f32 %v312, %v385
    %v530 = vsub.f32 %v313, %v386
    %v531 = vsub.f32 %v314, %v387
    %v532 = vsub.f32 %v315, %v388
    %v533 = vsub.f32 %v316, %v389
    %v534 = vsub.f32 %v317, %v390
    %v535 = vsub.f32 %v318, %v391
    %v536 = vsub.f32 %v319, %v392
    %v537 = vsub.f32 %v320, %v393
    %v538 = vsub.f32 %v321, %v394
    %v539 = vsub.f32 %v322, %v395
    %v540 = vsub.f32 %v323, %v396
    %v541 = vsub.f32 %v324, %v397
    %v542 = vadd.f32 %v506, 1e-05
    %v543 = vadd.f32 %v507, 1e-05
    %v544 = vadd.f32 %v508, 1e-05
    %v545 = vadd.f32 %v509, 1e-05
    %v546 = vadd.f32 %v510, 1e-05
    %v547 = vadd.f32 %v511, 1e-05
    %v548 = vadd.f32 %v512, 1e-05
    %v549 = vadd.f32 %v513, 1e-05
    %v550 = vadd.f32 %v514, 1e-05
    %v551 = vadd.f32 %v515, 1e-05
    %v552 = vadd.f32 %v516, 1e-05
    %v553 = vadd.f32 %v517, 1e-05
    %v554 = vadd.f32 %v518, 1e-05
    %v555 = vadd.f32 %v519, 1e-05
    %v556 = vadd.f32 %v520, 1e-05
    %v557 = vadd.f32 %v521, 1e-05
    %v558 = vadd.f32 %v522, 1e-05
    %v559 = vadd.f32 %v523, 1e-05
    %v560 = vrsqrt.pop %v542
    %v561 = vrsqrt.pop %v543
    %v562 = vrsqrt.pop %v544
    %v563 = vrsqrt.pop %v545
    %v564 = vrsqrt.pop %v546
    %v565 = vrsqrt.pop %v547
    %v566 = vrsqrt.pop %v548
    %v567 = vrsqrt.pop %v549
    %v568 = vrsqrt.pop %v550
    %v569 = vrsqrt.pop %v551
    %v570 = vrsqrt.pop %v552
    %v571 = vrsqrt.pop %v553
    %v572 = vrsqrt.pop %v554
    %v573 = vrsqrt.pop %v555
    %v574 = vrsqrt.pop %v556
    %v575 = vrsqrt.pop %v557
    %v576 = vrsqrt.pop %v558
    %v577 = vrsqrt.pop %v559
    %v578 = vmul.f32 %v524, %v560
    %v579 = vmul.f32 %v525, %v561
    %v580 = vmul.f32 %v526, %v562
    %v581 = vmul.f32 %v527, %v563
    %v582 = vmul.f32 %v528, %v564
    %v583 = vmul.f32 %v529, %v565
    %v584 = vmul.f32 %v530, %v566
    %v585 = vmul.f32 %v531, %v567
    %v586 = vmul.f32 %v532, %v568
    %v587 = vmul.f32 %v533, %v569
    %v588 = vmul.f32 %v534, %v570
    %v589 = vmul.f32 %v535, %v571
    %v590 = vmul.f32 %v536, %v572
    %v591 = vmul.f32 %v537, %v573
    %v592 = vmul.f32 %v538, %v574
    %v593 = vmul.f32 %v539, %v575
    %v594 = vmul.f32 %v540, %v576
    %v595 = vmul.f32 %v541, %v577
    %v596 = vlaneseq
    %v597 = vshrl.u32 %v596, 7
    %v598 = vsub.s32 1, %v597
    %v599 = vrot.slane %v34, %v598
    %v600 = vmul.f32 %v578, %v599
    %v601 = vmul.f32 %v579, %v599
    %v602 = vmul.f32 %v580, %v599
    %v603 = vmul.f32 %v581, %v599
    %v604 = vmul.f32 %v582, %v599
    %v605 = vmul.f32 %v583, %v599
    %v606 = vmul.f32 %v584, %v599
    %v607 = vmul.f32 %v585, %v599
    %v608 = vmul.f32 %v586, %v599
    %v609 = vmul.f32 %v587, %v599
    %v610 = vmul.f32 %v588, %v599
    %v611 = vmul.f32 %v589, %v599
    %v612 = vmul.f32 %v590, %v599
    %v613 = vmul.f32 %v591, %v599
    %v614 = vmul.f32 %v592, %v599
    %v615 = vmul.f32 %v593, %v599
    %v616 = vmul.f32 %v594, %v599
    %v617 = vmul.f32 %v595, %v599
    %v618 = vlaneseq
    %v619 = vshrl.u32 %v618, 7
    %v620 = vsub.s32 2, %v619
    %v621 = vrot.slane %v34, %v620
    %v622 = vadd.f32 %v600, %v621
    %v623 = vadd.f32 %v601, %v621
    %v624 = vadd.f32 %v602, %v621
    %v625 = vadd.f32 %v603, %v621
    %v626 = vadd.f32 %v604, %v621
    %v627 = vadd.f32 %v605, %v621
    %v628 = vadd.f32 %v606, %v621
    %v629 = vadd.f32 %v607, %v621
    %v630 = vadd.f32 %v608, %v621
    %v631 = vadd.f32 %v609, %v621
    %v632 = vadd.f32 %v610, %v621
    %v633 = vadd.f32 %v611, %v621
    %v634 = vadd.f32 %v612, %v621
    %v635 = vadd.f32 %v613, %v621
    %v636 = vadd.f32 %v614, %v621
    %v637 = vadd.f32 %v615, %v621
    %v638 = vadd.f32 %v616, %v621
    %v639 = vadd.f32 %v617, %v621
    %vm640 = vcmask 1048032
    %641 = vrot.lane.b32.xlu0 %v622, 60
    %v642 = vpop.permute.xlu0 %641
    %v643 = vsel %vm640, %v642, %v622
    %644 = vrot.lane.b32.xlu0 %v623, 60
    %v645 = vpop.permute.xlu0 %644
    %v646 = vsel %vm640, %v645, %v623
    %647 = vrot.lane.b32.xlu0 %v624, 60
    %v648 = vpop.permute.xlu0 %647
    %v649 = vsel %vm640, %v648, %v624
    %650 = vrot.lane.b32.xlu0 %v625, 60
    %v651 = vpop.permute.xlu0 %650
    %v652 = vsel %vm640, %v651, %v625
    %653 = vrot.lane.b32.xlu0 %v626, 60
    %v654 = vpop.permute.xlu0 %653
    %v655 = vsel %vm640, %v654, %v626
    %656 = vrot.lane.b32.xlu0 %v627, 60
    %v657 = vpop.permute.xlu0 %656
    %v658 = vsel %vm640, %v657, %v627
    %659 = vrot.lane.b32.xlu0 %v628, 60
    %v660 = vpop.permute.xlu0 %659
    %v661 = vsel %vm640, %v660, %v628
    %662 = vrot.lane.b32.xlu0 %v629, 60
    %v663 = vpop.permute.xlu0 %662
    %v664 = vsel %vm640, %v663, %v629
    %665 = vrot.lane.b32.xlu0 %v630, 60
    %v666 = vpop.permute.xlu0 %665
    %v667 = vsel %vm640, %v666, %v630
    %668 = vrot.lane.b32.xlu0 %v631, 60
    %v669 = vpop.permute.xlu0 %668
    %v670 = vsel %vm640, %v669, %v631
    %671 = vrot.lane.b32.xlu0 %v632, 60
    %v672 = vpop.permute.xlu0 %671
    %v673 = vsel %vm640, %v672, %v632
    %674 = vrot.lane.b32.xlu0 %v633, 60
    %v675 = vpop.permute.xlu0 %674
    %v676 = vsel %vm640, %v675, %v633
    %677 = vrot.lane.b32.xlu0 %v634, 60
    %v678 = vpop.permute.xlu0 %677
    %v679 = vsel %vm640, %v678, %v634
    %680 = vrot.lane.b32.xlu0 %v635, 60
    %v681 = vpop.permute.xlu0 %680
    %v682 = vsel %vm640, %v681, %v635
    %683 = vrot.lane.b32.xlu0 %v636, 60
    %v684 = vpop.permute.xlu0 %683
    %v685 = vsel %vm640, %v684, %v636
    %686 = vrot.lane.b32.xlu0 %v637, 60
    %v687 = vpop.permute.xlu0 %686
    %v688 = vsel %vm640, %v687, %v637
    %689 = vrot.lane.b32.xlu0 %v638, 60
    %v690 = vpop.permute.xlu0 %689
    %v691 = vsel %vm640, %v690, %v638
    %692 = vrot.lane.b32.xlu0 %v639, 60
    %v693 = vpop.permute.xlu0 %692
    %v694 = vsel %vm640, %v693, %v639
    %695 = vrot.lane.b32.xlu0 %v643, 60
    %v696 = vpop.permute.xlu0 %695
    %697 = vrot.lane.b32.xlu0 %v646, 60
    %v698 = vpop.permute.xlu0 %697
    %699 = vrot.lane.b32.xlu0 %v649, 60
    %v700 = vpop.permute.xlu0 %699
    %701 = vrot.lane.b32.xlu0 %v652, 60
    %v702 = vpop.permute.xlu0 %701
    %703 = vrot.lane.b32.xlu0 %v655, 60
    %v704 = vpop.permute.xlu0 %703
    %705 = vrot.lane.b32.xlu0 %v658, 60
    %v706 = vpop.permute.xlu0 %705
    %707 = vrot.lane.b32.xlu0 %v661, 60
    %v708 = vpop.permute.xlu0 %707
    %709 = vrot.lane.b32.xlu0 %v664, 60
    %v710 = vpop.permute.xlu0 %709
    %711 = vrot.lane.b32.xlu0 %v667, 60
    %v712 = vpop.permute.xlu0 %711
    %713 = vrot.lane.b32.xlu0 %v670, 60
    %v714 = vpop.permute.xlu0 %713
    %715 = vrot.lane.b32.xlu0 %v673, 60
    %v716 = vpop.permute.xlu0 %715
    %717 = vrot.lane.b32.xlu0 %v676, 60
    %v718 = vpop.permute.xlu0 %717
    %719 = vrot.lane.b32.xlu0 %v679, 60
    %v720 = vpop.permute.xlu0 %719
    %721 = vrot.lane.b32.xlu0 %v682, 60
    %v722 = vpop.permute.xlu0 %721
    %723 = vrot.lane.b32.xlu0 %v685, 60
    %v724 = vpop.permute.xlu0 %723
    %725 = vrot.lane.b32.xlu0 %v688, 60
    %v726 = vpop.permute.xlu0 %725
    %727 = vrot.lane.b32.xlu0 %v691, 60
    %v728 = vpop.permute.xlu0 %727
    %729 = vrot.lane.b32.xlu0 %v694, 60
    %v730 = vpop.permute.xlu0 %729
    %v731 = vsel %vm640, %v696, %v622
    %v732 = vsel %vm640, %v698, %v623
    %v733 = vsel %vm640, %v700, %v624
    %v734 = vsel %vm640, %v702, %v625
    %v735 = vsel %vm640, %v704, %v626
    %v736 = vsel %vm640, %v706, %v627
    %v737 = vsel %vm640, %v708, %v628
    %v738 = vsel %vm640, %v710, %v629
    %v739 = vsel %vm640, %v712, %v630
    %v740 = vsel %vm640, %v714, %v631
    %v741 = vsel %vm640, %v716, %v632
    %v742 = vsel %vm640, %v718, %v633
    %v743 = vsel %vm640, %v720, %v634
    %v744 = vsel %vm640, %v722, %v635
    %v745 = vsel %vm640, %v724, %v636
    %v746 = vsel %vm640, %v726, %v637
    %v747 = vsel %vm640, %v728, %v638
    %v748 = vsel %vm640, %v730, %v639
    %v749 = vlaneseq
    %v750 = vshrl.u32 %v749, 7
    %v751 = vsub.s32 2, %v750
    %v752 = vrot.slane %v35, %v751
    %771 = vrot.lane.b32.xlu0 %v731, 69
    %v772 = vpop.permute.xlu0 %771
    %773 = vrot.lane.b32.xlu0 %v732, 69
    %v774 = vpop.permute.xlu0 %773
    %775 = vrot.lane.b32.xlu0 %v733, 69
    %v776 = vpop.permute.xlu0 %775
    %777 = vrot.lane.b32.xlu0 %v734, 69
    %v778 = vpop.permute.xlu0 %777
    %779 = vrot.lane.b32.xlu0 %v735, 69
    %v780 = vpop.permute.xlu0 %779
    %781 = vrot.lane.b32.xlu0 %v736, 69
    %v782 = vpop.permute.xlu0 %781
    %783 = vrot.lane.b32.xlu0 %v737, 69
    %v784 = vpop.permute.xlu0 %783
    %785 = vrot.lane.b32.xlu0 %v738, 69
    %v786 = vpop.permute.xlu0 %785
    %787 = vrot.lane.b32.xlu0 %v739, 69
    %v788 = vpop.permute.xlu0 %787
    %789 = vrot.lane.b32.xlu0 %v740, 69
    %v790 = vpop.permute.xlu0 %789
    %791 = vrot.lane.b32.xlu0 %v741, 69
    %v792 = vpop.permute.xlu0 %791
    %793 = vrot.lane.b32.xlu0 %v742, 69
    %v794 = vpop.permute.xlu0 %793
    %795 = vrot.lane.b32.xlu0 %v743, 69
    %v796 = vpop.permute.xlu0 %795
    %797 = vrot.lane.b32.xlu0 %v744, 69
    %v798 = vpop.permute.xlu0 %797
    %799 = vrot.lane.b32.xlu0 %v745, 69
    %v800 = vpop.permute.xlu0 %799
    %801 = vrot.lane.b32.xlu0 %v746, 69
    %v802 = vpop.permute.xlu0 %801
    %803 = vrot.lane.b32.xlu0 %v747, 69
    %v804 = vpop.permute.xlu0 %803
    %805 = vrot.lane.b32.xlu0 %v748, 69
    %v806 = vpop.permute.xlu0 %805
    %v825 = vmul.f32 %v752, %v772
    %v826 = vmul.f32 %v752, %v774
    %v827 = vmul.f32 %v752, %v776
    %v828 = vmul.f32 %v752, %v778
    %v829 = vmul.f32 %v752, %v780
    %v830 = vmul.f32 %v752, %v782
    %v831 = vmul.f32 %v752, %v784
    %v832 = vmul.f32 %v752, %v786
    %v833 = vmul.f32 %v752, %v788
    %v834 = vmul.f32 %v752, %v790
    %v835 = vmul.f32 %v752, %v792
    %v836 = vmul.f32 %v752, %v794
    %v837 = vmul.f32 %v752, %v796
    %v838 = vmul.f32 %v752, %v798
    %v839 = vmul.f32 %v752, %v800
    %v840 = vmul.f32 %v752, %v802
    %v841 = vmul.f32 %v752, %v804
    %v842 = vmul.f32 %v752, %v806
    %v843 = vlaneseq
    %v844 = vshrl.u32 %v843, 7
    %v845 = vsub.s32 3, %v844
    %v846 = vrot.slane %v35, %v845
    %847 = vrot.lane.b32.xlu0 %v731, 127
    %v848 = vpop.permute.xlu0 %847
    %849 = vrot.lane.b32.xlu0 %v732, 127
    %v850 = vpop.permute.xlu0 %849
    %851 = vrot.lane.b32.xlu0 %v733, 127
    %v852 = vpop.permute.xlu0 %851
    %853 = vrot.lane.b32.xlu0 %v734, 127
    %v854 = vpop.permute.xlu0 %853
    %855 = vrot.lane.b32.xlu0 %v735, 127
    %v856 = vpop.permute.xlu0 %855
    %857 = vrot.lane.b32.xlu0 %v736, 127
    %v858 = vpop.permute.xlu0 %857
    %859 = vrot.lane.b32.xlu0 %v737, 127
    %v860 = vpop.permute.xlu0 %859
    %861 = vrot.lane.b32.xlu0 %v738, 127
    %v862 = vpop.permute.xlu0 %861
    %863 = vrot.lane.b32.xlu0 %v739, 127
    %v864 = vpop.permute.xlu0 %863
    %865 = vrot.lane.b32.xlu0 %v740, 127
    %v866 = vpop.permute.xlu0 %865
    %867 = vrot.lane.b32.xlu0 %v741, 127
    %v868 = vpop.permute.xlu0 %867
    %869 = vrot.lane.b32.xlu0 %v742, 127
    %v870 = vpop.permute.xlu0 %869
    %871 = vrot.lane.b32.xlu0 %v743, 127
    %v872 = vpop.permute.xlu0 %871
    %873 = vrot.lane.b32.xlu0 %v744, 127
    %v874 = vpop.permute.xlu0 %873
    %875 = vrot.lane.b32.xlu0 %v745, 127
    %v876 = vpop.permute.xlu0 %875
    %877 = vrot.lane.b32.xlu0 %v746, 127
    %v878 = vpop.permute.xlu0 %877
    %879 = vrot.lane.b32.xlu0 %v747, 127
    %v880 = vpop.permute.xlu0 %879
    %881 = vrot.lane.b32.xlu0 %v748, 127
    %v882 = vpop.permute.xlu0 %881
    %v901 = vmul.f32 %v846, %v848
    %v902 = vmul.f32 %v846, %v850
    %v903 = vmul.f32 %v846, %v852
    %v904 = vmul.f32 %v846, %v854
    %v905 = vmul.f32 %v846, %v856
    %v906 = vmul.f32 %v846, %v858
    %v907 = vmul.f32 %v846, %v860
    %v908 = vmul.f32 %v846, %v862
    %v909 = vmul.f32 %v846, %v864
    %v910 = vmul.f32 %v846, %v866
    %v911 = vmul.f32 %v846, %v868
    %v912 = vmul.f32 %v846, %v870
    %v913 = vmul.f32 %v846, %v872
    %v914 = vmul.f32 %v846, %v874
    %v915 = vmul.f32 %v846, %v876
    %v916 = vmul.f32 %v846, %v878
    %v917 = vmul.f32 %v846, %v880
    %v918 = vmul.f32 %v846, %v882
    %920 = vset.pattern.permute.xlu0 0
    %921 = vperm.xlu0 %920, %v36
    %v922 = vpop.permute.xlu0 %921
    %925 = vset.pattern.permute.xlu0 0
    %926 = vperm.xlu0 %925, %v37
    %v927 = vpop.permute.xlu0 %926
    %930 = vset.pattern.permute.xlu0 0
    %931 = vperm.xlu0 %930, %v38
    %v932 = vpop.permute.xlu0 %931
    %935 = vset.pattern.permute.xlu0 0
    %936 = vperm.xlu0 %935, %v39
    %v937 = vpop.permute.xlu0 %936
    %940 = vset.pattern.permute.xlu0 0
    %941 = vperm.xlu0 %940, %v40
    %v942 = vpop.permute.xlu0 %941
    %945 = vset.pattern.permute.xlu0 0
    %946 = vperm.xlu0 %945, %v41
    %v947 = vpop.permute.xlu0 %946
    %950 = vset.pattern.permute.xlu0 0
    %951 = vperm.xlu0 %950, %v42
    %v952 = vpop.permute.xlu0 %951
    %955 = vset.pattern.permute.xlu0 0
    %956 = vperm.xlu0 %955, %v43
    %v957 = vpop.permute.xlu0 %956
    %960 = vset.pattern.permute.xlu0 0
    %961 = vperm.xlu0 %960, %v44
    %v962 = vpop.permute.xlu0 %961
    %965 = vset.pattern.permute.xlu0 0
    %966 = vperm.xlu0 %965, %v45
    %v967 = vpop.permute.xlu0 %966
    %970 = vset.pattern.permute.xlu0 0
    %971 = vperm.xlu0 %970, %v46
    %v972 = vpop.permute.xlu0 %971
    %975 = vset.pattern.permute.xlu0 0
    %976 = vperm.xlu0 %975, %v47
    %v977 = vpop.permute.xlu0 %976
    %980 = vset.pattern.permute.xlu0 0
    %981 = vperm.xlu0 %980, %v48
    %v982 = vpop.permute.xlu0 %981
    %985 = vset.pattern.permute.xlu0 0
    %986 = vperm.xlu0 %985, %v49
    %v987 = vpop.permute.xlu0 %986
    %990 = vset.pattern.permute.xlu0 0
    %991 = vperm.xlu0 %990, %v50
    %v992 = vpop.permute.xlu0 %991
    %995 = vset.pattern.permute.xlu0 0
    %996 = vperm.xlu0 %995, %v51
    %v997 = vpop.permute.xlu0 %996
    %1000 = vset.pattern.permute.xlu0 0
    %1001 = vperm.xlu0 %1000, %v52
    %v1002 = vpop.permute.xlu0 %1001
    %1005 = vset.pattern.permute.xlu0 0
    %1006 = vperm.xlu0 %1005, %v53
    %v1007 = vpop.permute.xlu0 %1006
    %v1009 = vmul.f32 %v922, %v825
    %v1010 = vmul.f32 %v927, %v826
    %v1011 = vmul.f32 %v932, %v827
    %v1012 = vmul.f32 %v937, %v828
    %v1013 = vmul.f32 %v942, %v829
    %v1014 = vmul.f32 %v947, %v830
    %v1015 = vmul.f32 %v952, %v831
    %v1016 = vmul.f32 %v957, %v832
    %v1017 = vmul.f32 %v962, %v833
    %v1018 = vmul.f32 %v967, %v834
    %v1019 = vmul.f32 %v972, %v835
    %v1020 = vmul.f32 %v977, %v836
    %v1021 = vmul.f32 %v982, %v837
    %v1022 = vmul.f32 %v987, %v838
    %v1023 = vmul.f32 %v992, %v839
    %v1024 = vmul.f32 %v997, %v840
    %v1025 = vmul.f32 %v1002, %v841
    %v1026 = vmul.f32 %v1007, %v842
    %1027 = vset.pattern.permute.xlu0 1
    %1028 = vperm.xlu0 %1027, %v36
    %v1029 = vpop.permute.xlu0 %1028
    %1031 = vset.pattern.permute.xlu0 1
    %1032 = vperm.xlu0 %1031, %v37
    %v1033 = vpop.permute.xlu0 %1032
    %1035 = vset.pattern.permute.xlu0 1
    %1036 = vperm.xlu0 %1035, %v38
    %v1037 = vpop.permute.xlu0 %1036
    %1039 = vset.pattern.permute.xlu0 1
    %1040 = vperm.xlu0 %1039, %v39
    %v1041 = vpop.permute.xlu0 %1040
    %1043 = vset.pattern.permute.xlu0 1
    %1044 = vperm.xlu0 %1043, %v40
    %v1045 = vpop.permute.xlu0 %1044
    %1047 = vset.pattern.permute.xlu0 1
    %1048 = vperm.xlu0 %1047, %v41
    %v1049 = vpop.permute.xlu0 %1048
    %1051 = vset.pattern.permute.xlu0 1
    %1052 = vperm.xlu0 %1051, %v42
    %v1053 = vpop.permute.xlu0 %1052
    %1055 = vset.pattern.permute.xlu0 1
    %1056 = vperm.xlu0 %1055, %v43
    %v1057 = vpop.permute.xlu0 %1056
    %1059 = vset.pattern.permute.xlu0 1
    %1060 = vperm.xlu0 %1059, %v44
    %v1061 = vpop.permute.xlu0 %1060
    %1063 = vset.pattern.permute.xlu0 1
    %1064 = vperm.xlu0 %1063, %v45
    %v1065 = vpop.permute.xlu0 %1064
    %1067 = vset.pattern.permute.xlu0 1
    %1068 = vperm.xlu0 %1067, %v46
    %v1069 = vpop.permute.xlu0 %1068
    %1071 = vset.pattern.permute.xlu0 1
    %1072 = vperm.xlu0 %1071, %v47
    %v1073 = vpop.permute.xlu0 %1072
    %1075 = vset.pattern.permute.xlu0 1
    %1076 = vperm.xlu0 %1075, %v48
    %v1077 = vpop.permute.xlu0 %1076
    %1079 = vset.pattern.permute.xlu0 1
    %1080 = vperm.xlu0 %1079, %v49
    %v1081 = vpop.permute.xlu0 %1080
    %1083 = vset.pattern.permute.xlu0 1
    %1084 = vperm.xlu0 %1083, %v50
    %v1085 = vpop.permute.xlu0 %1084
    %1087 = vset.pattern.permute.xlu0 1
    %1088 = vperm.xlu0 %1087, %v51
    %v1089 = vpop.permute.xlu0 %1088
    %1091 = vset.pattern.permute.xlu0 1
    %1092 = vperm.xlu0 %1091, %v52
    %v1093 = vpop.permute.xlu0 %1092
    %1095 = vset.pattern.permute.xlu0 1
    %1096 = vperm.xlu0 %1095, %v53
    %v1097 = vpop.permute.xlu0 %1096
    %v1099 = vmul.f32 %v1029, %v622
    %v1100 = vmul.f32 %v1033, %v623
    %v1101 = vmul.f32 %v1037, %v624
    %v1102 = vmul.f32 %v1041, %v625
    %v1103 = vmul.f32 %v1045, %v626
    %v1104 = vmul.f32 %v1049, %v627
    %v1105 = vmul.f32 %v1053, %v628
    %v1106 = vmul.f32 %v1057, %v629
    %v1107 = vmul.f32 %v1061, %v630
    %v1108 = vmul.f32 %v1065, %v631
    %v1109 = vmul.f32 %v1069, %v632
    %v1110 = vmul.f32 %v1073, %v633
    %v1111 = vmul.f32 %v1077, %v634
    %v1112 = vmul.f32 %v1081, %v635
    %v1113 = vmul.f32 %v1085, %v636
    %v1114 = vmul.f32 %v1089, %v637
    %v1115 = vmul.f32 %v1093, %v638
    %v1116 = vmul.f32 %v1097, %v639
    %v1117 = vadd.f32 %v1009, %v1099
    %v1118 = vadd.f32 %v1010, %v1100
    %v1119 = vadd.f32 %v1011, %v1101
    %v1120 = vadd.f32 %v1012, %v1102
    %v1121 = vadd.f32 %v1013, %v1103
    %v1122 = vadd.f32 %v1014, %v1104
    %v1123 = vadd.f32 %v1015, %v1105
    %v1124 = vadd.f32 %v1016, %v1106
    %v1125 = vadd.f32 %v1017, %v1107
    %v1126 = vadd.f32 %v1018, %v1108
    %v1127 = vadd.f32 %v1019, %v1109
    %v1128 = vadd.f32 %v1020, %v1110
    %v1129 = vadd.f32 %v1021, %v1111
    %v1130 = vadd.f32 %v1022, %v1112
    %v1131 = vadd.f32 %v1023, %v1113
    %v1132 = vadd.f32 %v1024, %v1114
    %v1133 = vadd.f32 %v1025, %v1115
    %v1134 = vadd.f32 %v1026, %v1116
    %1135 = vset.pattern.permute.xlu0 2
    %1136 = vperm.xlu0 %1135, %v36
    %v1137 = vpop.permute.xlu0 %1136
    %1139 = vset.pattern.permute.xlu0 2
    %1140 = vperm.xlu0 %1139, %v37
    %v1141 = vpop.permute.xlu0 %1140
    %1143 = vset.pattern.permute.xlu0 2
    %1144 = vperm.xlu0 %1143, %v38
    %v1145 = vpop.permute.xlu0 %1144
    %1147 = vset.pattern.permute.xlu0 2
    %1148 = vperm.xlu0 %1147, %v39
    %v1149 = vpop.permute.xlu0 %1148
    %1151 = vset.pattern.permute.xlu0 2
    %1152 = vperm.xlu0 %1151, %v40
    %v1153 = vpop.permute.xlu0 %1152
    %1155 = vset.pattern.permute.xlu0 2
    %1156 = vperm.xlu0 %1155, %v41
    %v1157 = vpop.permute.xlu0 %1156
    %1159 = vset.pattern.permute.xlu0 2
    %1160 = vperm.xlu0 %1159, %v42
    %v1161 = vpop.permute.xlu0 %1160
    %1163 = vset.pattern.permute.xlu0 2
    %1164 = vperm.xlu0 %1163, %v43
    %v1165 = vpop.permute.xlu0 %1164
    %1167 = vset.pattern.permute.xlu0 2
    %1168 = vperm.xlu0 %1167, %v44
    %v1169 = vpop.permute.xlu0 %1168
    %1171 = vset.pattern.permute.xlu0 2
    %1172 = vperm.xlu0 %1171, %v45
    %v1173 = vpop.permute.xlu0 %1172
    %1175 = vset.pattern.permute.xlu0 2
    %1176 = vperm.xlu0 %1175, %v46
    %v1177 = vpop.permute.xlu0 %1176
    %1179 = vset.pattern.permute.xlu0 2
    %1180 = vperm.xlu0 %1179, %v47
    %v1181 = vpop.permute.xlu0 %1180
    %1183 = vset.pattern.permute.xlu0 2
    %1184 = vperm.xlu0 %1183, %v48
    %v1185 = vpop.permute.xlu0 %1184
    %1187 = vset.pattern.permute.xlu0 2
    %1188 = vperm.xlu0 %1187, %v49
    %v1189 = vpop.permute.xlu0 %1188
    %1191 = vset.pattern.permute.xlu0 2
    %1192 = vperm.xlu0 %1191, %v50
    %v1193 = vpop.permute.xlu0 %1192
    %1195 = vset.pattern.permute.xlu0 2
    %1196 = vperm.xlu0 %1195, %v51
    %v1197 = vpop.permute.xlu0 %1196
    %1199 = vset.pattern.permute.xlu0 2
    %1200 = vperm.xlu0 %1199, %v52
    %v1201 = vpop.permute.xlu0 %1200
    %1203 = vset.pattern.permute.xlu0 2
    %1204 = vperm.xlu0 %1203, %v53
    %v1205 = vpop.permute.xlu0 %1204
    %v1207 = vmul.f32 %v1137, %v901
    %v1208 = vmul.f32 %v1141, %v902
    %v1209 = vmul.f32 %v1145, %v903
    %v1210 = vmul.f32 %v1149, %v904
    %v1211 = vmul.f32 %v1153, %v905
    %v1212 = vmul.f32 %v1157, %v906
    %v1213 = vmul.f32 %v1161, %v907
    %v1214 = vmul.f32 %v1165, %v908
    %v1215 = vmul.f32 %v1169, %v909
    %v1216 = vmul.f32 %v1173, %v910
    %v1217 = vmul.f32 %v1177, %v911
    %v1218 = vmul.f32 %v1181, %v912
    %v1219 = vmul.f32 %v1185, %v913
    %v1220 = vmul.f32 %v1189, %v914
    %v1221 = vmul.f32 %v1193, %v915
    %v1222 = vmul.f32 %v1197, %v916
    %v1223 = vmul.f32 %v1201, %v917
    %v1224 = vmul.f32 %v1205, %v918
    %v1225 = vadd.f32 %v1117, %v1207
    %v1226 = vadd.f32 %v1118, %v1208
    %v1227 = vadd.f32 %v1119, %v1209
    %v1228 = vadd.f32 %v1120, %v1210
    %v1229 = vadd.f32 %v1121, %v1211
    %v1230 = vadd.f32 %v1122, %v1212
    %v1231 = vadd.f32 %v1123, %v1213
    %v1232 = vadd.f32 %v1124, %v1214
    %v1233 = vadd.f32 %v1125, %v1215
    %v1234 = vadd.f32 %v1126, %v1216
    %v1235 = vadd.f32 %v1127, %v1217
    %v1236 = vadd.f32 %v1128, %v1218
    %v1237 = vadd.f32 %v1129, %v1219
    %v1238 = vadd.f32 %v1130, %v1220
    %v1239 = vadd.f32 %v1131, %v1221
    %v1240 = vadd.f32 %v1132, %v1222
    %v1241 = vadd.f32 %v1133, %v1223
    %v1242 = vadd.f32 %v1134, %v1224
    %1243 = vset.pattern.permute.xlu0 3
    %1244 = vperm.xlu0 %1243, %v36
    %v1245 = vpop.permute.xlu0 %1244
    %1247 = vset.pattern.permute.xlu0 3
    %1248 = vperm.xlu0 %1247, %v37
    %v1249 = vpop.permute.xlu0 %1248
    %1251 = vset.pattern.permute.xlu0 3
    %1252 = vperm.xlu0 %1251, %v38
    %v1253 = vpop.permute.xlu0 %1252
    %1255 = vset.pattern.permute.xlu0 3
    %1256 = vperm.xlu0 %1255, %v39
    %v1257 = vpop.permute.xlu0 %1256
    %1259 = vset.pattern.permute.xlu0 3
    %1260 = vperm.xlu0 %1259, %v40
    %v1261 = vpop.permute.xlu0 %1260
    %1263 = vset.pattern.permute.xlu0 3
    %1264 = vperm.xlu0 %1263, %v41
    %v1265 = vpop.permute.xlu0 %1264
    %1267 = vset.pattern.permute.xlu0 3
    %1268 = vperm.xlu0 %1267, %v42
    %v1269 = vpop.permute.xlu0 %1268
    %1271 = vset.pattern.permute.xlu0 3
    %1272 = vperm.xlu0 %1271, %v43
    %v1273 = vpop.permute.xlu0 %1272
    %1275 = vset.pattern.permute.xlu0 3
    %1276 = vperm.xlu0 %1275, %v44
    %v1277 = vpop.permute.xlu0 %1276
    %1279 = vset.pattern.permute.xlu0 3
    %1280 = vperm.xlu0 %1279, %v45
    %v1281 = vpop.permute.xlu0 %1280
    %1283 = vset.pattern.permute.xlu0 3
    %1284 = vperm.xlu0 %1283, %v46
    %v1285 = vpop.permute.xlu0 %1284
    %1287 = vset.pattern.permute.xlu0 3
    %1288 = vperm.xlu0 %1287, %v47
    %v1289 = vpop.permute.xlu0 %1288
    %1291 = vset.pattern.permute.xlu0 3
    %1292 = vperm.xlu0 %1291, %v48
    %v1293 = vpop.permute.xlu0 %1292
    %1295 = vset.pattern.permute.xlu0 3
    %1296 = vperm.xlu0 %1295, %v49
    %v1297 = vpop.permute.xlu0 %1296
    %1299 = vset.pattern.permute.xlu0 3
    %1300 = vperm.xlu0 %1299, %v50
    %v1301 = vpop.permute.xlu0 %1300
    %1303 = vset.pattern.permute.xlu0 3
    %1304 = vperm.xlu0 %1303, %v51
    %v1305 = vpop.permute.xlu0 %1304
    %1307 = vset.pattern.permute.xlu0 3
    %1308 = vperm.xlu0 %1307, %v52
    %v1309 = vpop.permute.xlu0 %1308
    %1311 = vset.pattern.permute.xlu0 3
    %1312 = vperm.xlu0 %1311, %v53
    %v1313 = vpop.permute.xlu0 %1312
    %v1315 = vadd.f32 %v1225, %v1245
    %v1316 = vadd.f32 %v1226, %v1249
    %v1317 = vadd.f32 %v1227, %v1253
    %v1318 = vadd.f32 %v1228, %v1257
    %v1319 = vadd.f32 %v1229, %v1261
    %v1320 = vadd.f32 %v1230, %v1265
    %v1321 = vadd.f32 %v1231, %v1269
    %v1322 = vadd.f32 %v1232, %v1273
    %v1323 = vadd.f32 %v1233, %v1277
    %v1324 = vadd.f32 %v1234, %v1281
    %v1325 = vadd.f32 %v1235, %v1285
    %v1326 = vadd.f32 %v1236, %v1289
    %v1327 = vadd.f32 %v1237, %v1293
    %v1328 = vadd.f32 %v1238, %v1297
    %v1329 = vadd.f32 %v1239, %v1301
    %v1330 = vadd.f32 %v1240, %v1305
    %v1331 = vadd.f32 %v1241, %v1309
    %v1332 = vadd.f32 %v1242, %v1313
    %v1333 = vpack.c.bf16 %v1316, %v1315
    %v1334 = vpack.c.bf16 %v1318, %v1317
    %v1335 = vpack.c.bf16 %v1320, %v1319
    %v1336 = vpack.c.bf16 %v1322, %v1321
    %v1337 = vpack.c.bf16 %v1324, %v1323
    %v1338 = vpack.c.bf16 %v1326, %v1325
    %v1339 = vpack.c.bf16 %v1328, %v1327
    %v1340 = vpack.c.bf16 %v1330, %v1329
    %v1341 = vpack.c.bf16 %v1332, %v1331
    %v1342 = vld [vmem:[%s5] sm:$0xf]
    %v1343 = vld [vmem:[%s5 + $0x4] sm:$0xf]
    %v1344 = vld [vmem:[%s5 + $0x8] sm:$0xf]
    %v1345 = vld [vmem:[%s5 + $0xc] sm:$0xf]
    %v1346 = vld [vmem:[%s5 + $0x10] sm:$0xf]
    %v1347 = vld [vmem:[%s5 + $0x14] sm:$0xf]
    %v1348 = vld [vmem:[%s5 + $0x18] sm:$0xf]
    %v1349 = vld [vmem:[%s5 + $0x1c] sm:$0xf]
    %v1350 = vld [vmem:[%s5 + $0x20] sm:$0xf]
    %v1360 = vunpack.c.l.b16 %v1342
    %v1361 = vunpack.c.l.b16 %v1343
    %v1362 = vunpack.c.l.b16 %v1344
    %v1363 = vunpack.c.l.b16 %v1345
    %v1364 = vunpack.c.l.b16 %v1346
    %v1365 = vunpack.c.l.b16 %v1347
    %v1366 = vunpack.c.l.b16 %v1348
    %v1367 = vunpack.c.l.b16 %v1349
    %v1368 = vunpack.c.l.b16 %v1350
    %v1369 = vpack.c.b16 %v1361, %v1360
    %v1370 = vpack.c.b16 %v1363, %v1362
    %v1371 = vpack.c.b16 %v1365, %v1364
    %v1372 = vpack.c.b16 %v1367, %v1366
    %v1373 = vpack.c.b16 %v1368, %v1368
    %vm1374 = vcmask 588800
    %v1376 = vsel %vm1374, %v1369, 0
    %v1379 = vsel %vm1374, %v1370, 0
    %v1382 = vsel %vm1374, %v1371, 0
    %v1385 = vsel %vm1374, %v1372, 0
    %v1388 = vsel %vm1374, %v1373, 0
    %vm1390 = vcmask 1043456
    %v1392 = vsel %vm1390, %v1337, 0
    %1394 = vmatprep.subr.bf16.mxu0 0
    %1395 = vmatpush1.bf16.msra.mxu0 0
    %1396 = vmatprep.subr.bf16.mxu0 0
    %1397 = vmatpush1.bf16.msra.mxu0 0
    %1398 = vmatprep.subr.bf16.mxu0 0
    %1399 = vmatpush1.bf16.msra.mxu0 0
    %1400 = vmatprep.subr.bf16.mxu0 0
    %1401 = vmatpush1.bf16.msra.mxu0 %v1392
    %1402 = vmatprep.subr.bf16.mxu0 0
    %1403 = vmatpush1.bf16.msra.mxu0 %v1336
    %1404 = vmatprep.subr.bf16.mxu0 0
    %1405 = vmatpush1.bf16.msra.mxu0 %v1335
    %1406 = vmatprep.subr.bf16.mxu0 0
    %1407 = vmatpush1.bf16.msra.mxu0 %v1334
    %1408 = vmatprep.subr.bf16.mxu0 0
    %1409 = vmatpush1.bf16.msra.mxu0 %v1333
    %1410 = vmatprep.subr.bf16.mxu0 0
    %1411 = vmatpush2.bf16.msra.mxu0 0
    %1412 = vmatprep.subr.bf16.mxu0 0
    %1413 = vmatpush2.bf16.msra.mxu0 0
    %1414 = vmatprep.subr.bf16.mxu0 0
    %1415 = vmatpush2.bf16.msra.mxu0 0
    %1416 = vmatprep.subr.bf16.mxu0 0
    %1417 = vmatpush2.bf16.msra.mxu0 0
    %1418 = vmatprep.subr.bf16.mxu0 0
    %1419 = vmatpush2.bf16.msra.mxu0 0
    %1420 = vmatprep.subr.bf16.mxu0 0
    %1421 = vmatpush2.bf16.msra.mxu0 0
    %1422 = vmatprep.subr.bf16.mxu0 0
    %1423 = vmatpush2.bf16.msra.mxu0 0
    %1424 = vmatprep.subr.bf16.mxu0 0
    %1425 = vmatpush2.bf16.msra.mxu0 0
    %1426 = vmatprep.mubr.bf16.mxu0 0
    %1427 = vmatmul.mubr.bf16.gmra.mxu0 %v1376
    %v1428 = vpop.f32.mrf.mxu0
    %v1429 = vadd.f32 0.0, %v1428
    %v1430 = vpop.f32.mrf.mxu0
    %v1431 = vpop.f32.mrf.mxu0
    %v1432 = vadd.f32 0.0, %v1431
    %v1433 = vpop.f32.mrf.mxu0
    %1434 = vmatprep.mubr.bf16.mxu0 0
    %1435 = vmatmul.mubr.bf16.gmra.mxu0 %v1379
    %v1436 = vpop.f32.mrf.mxu0
    %v1437 = vadd.f32 0.0, %v1436
    %v1438 = vpop.f32.mrf.mxu0
    %v1439 = vpop.f32.mrf.mxu0
    %v1440 = vadd.f32 0.0, %v1439
    %v1441 = vpop.f32.mrf.mxu0
    %1442 = vmatprep.mubr.bf16.mxu0 0
    %1443 = vmatmul.mubr.bf16.gmra.mxu0 %v1382
    %v1444 = vpop.f32.mrf.mxu0
    %v1445 = vadd.f32 0.0, %v1444
    %v1446 = vpop.f32.mrf.mxu0
    %v1447 = vpop.f32.mrf.mxu0
    %v1448 = vadd.f32 0.0, %v1447
    %v1449 = vpop.f32.mrf.mxu0
    %1450 = vmatprep.mubr.bf16.mxu0 0
    %1451 = vmatmul.mubr.bf16.gmra.mxu0 %v1385
    %v1452 = vpop.f32.mrf.mxu0
    %v1453 = vadd.f32 0.0, %v1452
    %v1454 = vpop.f32.mrf.mxu0
    %v1455 = vpop.f32.mrf.mxu0
    %v1456 = vadd.f32 0.0, %v1455
    %v1457 = vpop.f32.mrf.mxu0
    %1458 = vmatprep.mubr.bf16.mxu0 0
    %1459 = vmatmul.mubr.bf16.gmra.mxu0 %v1388
    %v1460 = vpop.f32.mrf.mxu0
    %v1461 = vadd.f32 0.0, %v1460
    %v1462 = vpop.f32.mrf.mxu0
    %v1463 = vpop.f32.mrf.mxu0
    %v1464 = vpop.f32.mrf.mxu0
    %1465 = vdwg.mxu0
    %1466 = vst.msk [vmem:[#allocation2] sm:$0xff] %vm152, %v1429
    %1467 = vst.msk [vmem:[#allocation2 + $0x8] sm:$0xff] %vm152, %v1432
    %1468 = vst.msk [vmem:[#allocation2 + $0x10] sm:$0xff] %vm152, %v1437
    %1469 = vst.msk [vmem:[#allocation2 + $0x18] sm:$0xff] %vm152, %v1440
    %1470 = vst.msk [vmem:[#allocation2 + $0x20] sm:$0xff] %vm152, %v1445
    %1471 = vst.msk [vmem:[#allocation2 + $0x28] sm:$0xff] %vm152, %v1448
    %1472 = vst.msk [vmem:[#allocation2 + $0x30] sm:$0xff] %vm152, %v1453
    %1473 = vst.msk [vmem:[#allocation2 + $0x38] sm:$0xff] %vm152, %v1456
    %1474 = vst.msk [vmem:[#allocation2 + $0x40] sm:$0xff] %vm152, %v1461
    %vm1480 = vcmask 1043456
    %v1481 = vrot.slane %v1337, 4
    %v1482 = vrot.slane %v1338, 4
    %v1483 = vsel %vm1480, %v1481, %v1482
    %v1484 = vrot.slane %v1339, 4
    %v1485 = vsel %vm1480, %v1482, %v1484
    %v1486 = vrot.slane %v1340, 4
    %v1487 = vsel %vm1480, %v1484, %v1486
    %v1488 = vrot.slane %v1341, 4
    %v1489 = vsel %vm1480, %v1486, %v1488
    %v1495 = vsel %vm1390, %v1488, 0
    %1497 = vmatprep.subr.bf16.mxu0 0
    %1498 = vmatpush1.bf16.msra.mxu0 0
    %1499 = vmatprep.subr.bf16.mxu0 0
    %1500 = vmatpush1.bf16.msra.mxu0 0
    %1501 = vmatprep.subr.bf16.mxu0 0
    %1502 = vmatpush1.bf16.msra.mxu0 0
    %1503 = vmatprep.subr.bf16.mxu0 0
    %1504 = vmatpush1.bf16.msra.mxu0 %v1495
    %1505 = vmatprep.subr.bf16.mxu0 0
    %1506 = vmatpush1.bf16.msra.mxu0 %v1489
    %1507 = vmatprep.subr.bf16.mxu0 0
    %1508 = vmatpush1.bf16.msra.mxu0 %v1487
    %1509 = vmatprep.subr.bf16.mxu0 0
    %1510 = vmatpush1.bf16.msra.mxu0 %v1485
    %1511 = vmatprep.subr.bf16.mxu0 0
    %1512 = vmatpush1.bf16.msra.mxu0 %v1483
    %1513 = vmatprep.subr.bf16.mxu0 0
    %1514 = vmatpush2.bf16.msra.mxu0 0
    %1515 = vmatprep.subr.bf16.mxu0 0
    %1516 = vmatpush2.bf16.msra.mxu0 0
    %1517 = vmatprep.subr.bf16.mxu0 0
    %1518 = vmatpush2.bf16.msra.mxu0 0
    %1519 = vmatprep.subr.bf16.mxu0 0
    %1520 = vmatpush2.bf16.msra.mxu0 0
    %1521 = vmatprep.subr.bf16.mxu0 0
    %1522 = vmatpush2.bf16.msra.mxu0 0
    %1523 = vmatprep.subr.bf16.mxu0 0
    %1524 = vmatpush2.bf16.msra.mxu0 0
    %1525 = vmatprep.subr.bf16.mxu0 0
    %1526 = vmatpush2.bf16.msra.mxu0 0
    %1527 = vmatprep.subr.bf16.mxu0 0
    %1528 = vmatpush2.bf16.msra.mxu0 0
    %1529 = vmatprep.mubr.bf16.mxu0 0
    %1530 = vmatmul.mubr.bf16.gmra.mxu0 %v1376
    %v1531 = vpop.f32.mrf.mxu0
    %v1532 = vadd.f32 0.0, %v1531
    %v1533 = vpop.f32.mrf.mxu0
    %v1534 = vpop.f32.mrf.mxu0
    %v1535 = vadd.f32 0.0, %v1534
    %v1536 = vpop.f32.mrf.mxu0
    %1537 = vmatprep.mubr.bf16.mxu0 0
    %1538 = vmatmul.mubr.bf16.gmra.mxu0 %v1379
    %v1539 = vpop.f32.mrf.mxu0
    %v1540 = vadd.f32 0.0, %v1539
    %v1541 = vpop.f32.mrf.mxu0
    %v1542 = vpop.f32.mrf.mxu0
    %v1543 = vadd.f32 0.0, %v1542
    %v1544 = vpop.f32.mrf.mxu0
    %1545 = vmatprep.mubr.bf16.mxu0 0
    %1546 = vmatmul.mubr.bf16.gmra.mxu0 %v1382
    %v1547 = vpop.f32.mrf.mxu0
    %v1548 = vadd.f32 0.0, %v1547
    %v1549 = vpop.f32.mrf.mxu0
    %v1550 = vpop.f32.mrf.mxu0
    %v1551 = vadd.f32 0.0, %v1550
    %v1552 = vpop.f32.mrf.mxu0
    %1553 = vmatprep.mubr.bf16.mxu0 0
    %1554 = vmatmul.mubr.bf16.gmra.mxu0 %v1385
    %v1555 = vpop.f32.mrf.mxu0
    %v1556 = vadd.f32 0.0, %v1555
    %v1557 = vpop.f32.mrf.mxu0
    %v1558 = vpop.f32.mrf.mxu0
    %v1559 = vadd.f32 0.0, %v1558
    %v1560 = vpop.f32.mrf.mxu0
    %1561 = vmatprep.mubr.bf16.mxu0 0
    %1562 = vmatmul.mubr.bf16.gmra.mxu0 %v1388
    %v1563 = vpop.f32.mrf.mxu0
    %v1564 = vadd.f32 0.0, %v1563
    %v1565 = vpop.f32.mrf.mxu0
    %v1566 = vpop.f32.mrf.mxu0
    %v1567 = vpop.f32.mrf.mxu0
    %1568 = vdwg.mxu0
    %1569 = vst.msk [vmem:[#allocation2 + $0x48] sm:$0xff] %vm152, %v1532
    %1570 = vst.msk [vmem:[#allocation2 + $0x50] sm:$0xff] %vm152, %v1535
    %1571 = vst.msk [vmem:[#allocation2 + $0x58] sm:$0xff] %vm152, %v1540
    %1572 = vst.msk [vmem:[#allocation2 + $0x60] sm:$0xff] %vm152, %v1543
    %1573 = vst.msk [vmem:[#allocation2 + $0x68] sm:$0xff] %vm152, %v1548
    %1574 = vst.msk [vmem:[#allocation2 + $0x70] sm:$0xff] %vm152, %v1551
    %1575 = vst.msk [vmem:[#allocation2 + $0x78] sm:$0xff] %vm152, %v1556
    %1576 = vst.msk [vmem:[#allocation2 + $0x80] sm:$0xff] %vm152, %v1559
    %1577 = vst.msk [vmem:[#allocation2 + $0x88] sm:$0xff] %vm152, %v1564
    %v1578 = vld [vmem:[#allocation2] sm:$0xff]
    %v1579 = vld [vmem:[#allocation2 + $0x8] sm:$0xff]
    %v1580 = vld [vmem:[#allocation2 + $0x10] sm:$0xff]
    %v1581 = vld [vmem:[#allocation2 + $0x18] sm:$0xff]
    %v1582 = vld [vmem:[#allocation2 + $0x20] sm:$0xff]
    %v1583 = vld [vmem:[#allocation2 + $0x28] sm:$0xff]
    %v1584 = vld [vmem:[#allocation2 + $0x30] sm:$0xff]
    %v1585 = vld [vmem:[#allocation2 + $0x38] sm:$0xff]
    %v1586 = vld [vmem:[#allocation2 + $0x40] sm:$0xff]
    %v1587 = vld [vmem:[#allocation2 + $0x48] sm:$0xff]
    %v1588 = vld [vmem:[#allocation2 + $0x50] sm:$0xff]
    %v1589 = vld [vmem:[#allocation2 + $0x58] sm:$0xff]
    %v1590 = vld [vmem:[#allocation2 + $0x60] sm:$0xff]
    %v1591 = vld [vmem:[#allocation2 + $0x68] sm:$0xff]
    %v1592 = vld [vmem:[#allocation2 + $0x70] sm:$0xff]
    %v1593 = vld [vmem:[#allocation2 + $0x78] sm:$0xff]
    %v1594 = vld [vmem:[#allocation2 + $0x80] sm:$0xff]
    %v1595 = vld [vmem:[#allocation2 + $0x88] sm:$0xff]
    %1596 = vset.pattern.permute.xlu0 4
    %1597 = vperm.xlu0 %1596, %v36
    %v1598 = vpop.permute.xlu0 %1597
    %1600 = vset.pattern.permute.xlu0 4
    %1601 = vperm.xlu0 %1600, %v37
    %v1602 = vpop.permute.xlu0 %1601
    %1604 = vset.pattern.permute.xlu0 4
    %1605 = vperm.xlu0 %1604, %v38
    %v1606 = vpop.permute.xlu0 %1605
    %1608 = vset.pattern.permute.xlu0 4
    %1609 = vperm.xlu0 %1608, %v39
    %v1610 = vpop.permute.xlu0 %1609
    %1612 = vset.pattern.permute.xlu0 4
    %1613 = vperm.xlu0 %1612, %v40
    %v1614 = vpop.permute.xlu0 %1613
    %1616 = vset.pattern.permute.xlu0 4
    %1617 = vperm.xlu0 %1616, %v41
    %v1618 = vpop.permute.xlu0 %1617
    %1620 = vset.pattern.permute.xlu0 4
    %1621 = vperm.xlu0 %1620, %v42
    %v1622 = vpop.permute.xlu0 %1621
    %1624 = vset.pattern.permute.xlu0 4
    %1625 = vperm.xlu0 %1624, %v43
    %v1626 = vpop.permute.xlu0 %1625
    %1628 = vset.pattern.permute.xlu0 4
    %1629 = vperm.xlu0 %1628, %v44
    %v1630 = vpop.permute.xlu0 %1629
    %1632 = vset.pattern.permute.xlu0 4
    %1633 = vperm.xlu0 %1632, %v45
    %v1634 = vpop.permute.xlu0 %1633
    %1636 = vset.pattern.permute.xlu0 4
    %1637 = vperm.xlu0 %1636, %v46
    %v1638 = vpop.permute.xlu0 %1637
    %1640 = vset.pattern.permute.xlu0 4
    %1641 = vperm.xlu0 %1640, %v47
    %v1642 = vpop.permute.xlu0 %1641
    %1644 = vset.pattern.permute.xlu0 4
    %1645 = vperm.xlu0 %1644, %v48
    %v1646 = vpop.permute.xlu0 %1645
    %1648 = vset.pattern.permute.xlu0 4
    %1649 = vperm.xlu0 %1648, %v49
    %v1650 = vpop.permute.xlu0 %1649
    %1652 = vset.pattern.permute.xlu0 4
    %1653 = vperm.xlu0 %1652, %v50
    %v1654 = vpop.permute.xlu0 %1653
    %1656 = vset.pattern.permute.xlu0 4
    %1657 = vperm.xlu0 %1656, %v51
    %v1658 = vpop.permute.xlu0 %1657
    %1660 = vset.pattern.permute.xlu0 4
    %1661 = vperm.xlu0 %1660, %v52
    %v1662 = vpop.permute.xlu0 %1661
    %1664 = vset.pattern.permute.xlu0 4
    %1665 = vperm.xlu0 %1664, %v53
    %v1666 = vpop.permute.xlu0 %1665
    %v1668 = vadd.f32 %v1578, %v1598
    %v1669 = vadd.f32 %v1579, %v1602
    %v1670 = vadd.f32 %v1580, %v1606
    %v1671 = vadd.f32 %v1581, %v1610
    %v1672 = vadd.f32 %v1582, %v1614
    %v1673 = vadd.f32 %v1583, %v1618
    %v1674 = vadd.f32 %v1584, %v1622
    %v1675 = vadd.f32 %v1585, %v1626
    %v1676 = vadd.f32 %v1586, %v1630
    %v1677 = vadd.f32 %v1587, %v1634
    %v1678 = vadd.f32 %v1588, %v1638
    %v1679 = vadd.f32 %v1589, %v1642
    %v1680 = vadd.f32 %v1590, %v1646
    %v1681 = vadd.f32 %v1591, %v1650
    %v1682 = vadd.f32 %v1592, %v1654
    %v1683 = vadd.f32 %v1593, %v1658
    %v1684 = vadd.f32 %v1594, %v1662
    %v1685 = vadd.f32 %v1595, %v1666
    %v1686 = vadd.f32 %v307, %v1668
    %v1687 = vadd.f32 %v308, %v1669
    %v1688 = vadd.f32 %v309, %v1670
    %v1689 = vadd.f32 %v310, %v1671
    %v1690 = vadd.f32 %v311, %v1672
    %v1691 = vadd.f32 %v312, %v1673
    %v1692 = vadd.f32 %v313, %v1674
    %v1693 = vadd.f32 %v314, %v1675
    %v1694 = vadd.f32 %v315, %v1676
    %v1695 = vadd.f32 %v316, %v1677
    %v1696 = vadd.f32 %v317, %v1678
    %v1697 = vadd.f32 %v318, %v1679
    %v1698 = vadd.f32 %v319, %v1680
    %v1699 = vadd.f32 %v320, %v1681
    %v1700 = vadd.f32 %v321, %v1682
    %v1701 = vadd.f32 %v322, %v1683
    %v1702 = vadd.f32 %v323, %v1684
    %v1703 = vadd.f32 %v324, %v1685
    %v1704 = vsel %vm152, %v1686, 0.0
    %1705 = vadd.xlane.f32.xlu0 %v1704
    %v1706 = vpop.xlane.xlu0 %1705
    %v1707 = vsel %vm152, %v1687, 0.0
    %1708 = vadd.xlane.f32.xlu0 %v1707
    %v1709 = vpop.xlane.xlu0 %1708
    %v1710 = vsel %vm152, %v1688, 0.0
    %1711 = vadd.xlane.f32.xlu0 %v1710
    %v1712 = vpop.xlane.xlu0 %1711
    %v1713 = vsel %vm152, %v1689, 0.0
    %1714 = vadd.xlane.f32.xlu0 %v1713
    %v1715 = vpop.xlane.xlu0 %1714
    %v1716 = vsel %vm152, %v1690, 0.0
    %1717 = vadd.xlane.f32.xlu0 %v1716
    %v1718 = vpop.xlane.xlu0 %1717
    %v1719 = vsel %vm152, %v1691, 0.0
    %1720 = vadd.xlane.f32.xlu0 %v1719
    %v1721 = vpop.xlane.xlu0 %1720
    %v1722 = vsel %vm152, %v1692, 0.0
    %1723 = vadd.xlane.f32.xlu0 %v1722
    %v1724 = vpop.xlane.xlu0 %1723
    %v1725 = vsel %vm152, %v1693, 0.0
    %1726 = vadd.xlane.f32.xlu0 %v1725
    %v1727 = vpop.xlane.xlu0 %1726
    %v1728 = vsel %vm152, %v1694, 0.0
    %1729 = vadd.xlane.f32.xlu0 %v1728
    %v1730 = vpop.xlane.xlu0 %1729
    %v1731 = vsel %vm152, %v1695, 0.0
    %1732 = vadd.xlane.f32.xlu0 %v1731
    %v1733 = vpop.xlane.xlu0 %1732
    %v1734 = vsel %vm152, %v1696, 0.0
    %1735 = vadd.xlane.f32.xlu0 %v1734
    %v1736 = vpop.xlane.xlu0 %1735
    %v1737 = vsel %vm152, %v1697, 0.0
    %1738 = vadd.xlane.f32.xlu0 %v1737
    %v1739 = vpop.xlane.xlu0 %1738
    %v1740 = vsel %vm152, %v1698, 0.0
    %1741 = vadd.xlane.f32.xlu0 %v1740
    %v1742 = vpop.xlane.xlu0 %1741
    %v1743 = vsel %vm152, %v1699, 0.0
    %1744 = vadd.xlane.f32.xlu0 %v1743
    %v1745 = vpop.xlane.xlu0 %1744
    %v1746 = vsel %vm152, %v1700, 0.0
    %1747 = vadd.xlane.f32.xlu0 %v1746
    %v1748 = vpop.xlane.xlu0 %1747
    %v1749 = vsel %vm152, %v1701, 0.0
    %1750 = vadd.xlane.f32.xlu0 %v1749
    %v1751 = vpop.xlane.xlu0 %1750
    %v1752 = vsel %vm152, %v1702, 0.0
    %1753 = vadd.xlane.f32.xlu0 %v1752
    %v1754 = vpop.xlane.xlu0 %1753
    %v1755 = vsel %vm152, %v1703, 0.0
    %1756 = vadd.xlane.f32.xlu0 %v1755
    %v1757 = vpop.xlane.xlu0 %1756
    %v1758 = vmul.f32 %v1706, %v379
    %v1759 = vmul.f32 %v1709, %v379
    %v1760 = vmul.f32 %v1712, %v379
    %v1761 = vmul.f32 %v1715, %v379
    %v1762 = vmul.f32 %v1718, %v379
    %v1763 = vmul.f32 %v1721, %v379
    %v1764 = vmul.f32 %v1724, %v379
    %v1765 = vmul.f32 %v1727, %v379
    %v1766 = vmul.f32 %v1730, %v379
    %v1767 = vmul.f32 %v1733, %v379
    %v1768 = vmul.f32 %v1736, %v379
    %v1769 = vmul.f32 %v1739, %v379
    %v1770 = vmul.f32 %v1742, %v379
    %v1771 = vmul.f32 %v1745, %v379
    %v1772 = vmul.f32 %v1748, %v379
    %v1773 = vmul.f32 %v1751, %v379
    %v1774 = vmul.f32 %v1754, %v379
    %v1775 = vmul.f32 %v1757, %v379
    %v1776 = vmul.f32 %v1686, %v1686
    %v1777 = vmul.f32 %v1687, %v1687
    %v1778 = vmul.f32 %v1688, %v1688
    %v1779 = vmul.f32 %v1689, %v1689
    %v1780 = vmul.f32 %v1690, %v1690
    %v1781 = vmul.f32 %v1691, %v1691
    %v1782 = vmul.f32 %v1692, %v1692
    %v1783 = vmul.f32 %v1693, %v1693
    %v1784 = vmul.f32 %v1694, %v1694
    %v1785 = vmul.f32 %v1695, %v1695
    %v1786 = vmul.f32 %v1696, %v1696
    %v1787 = vmul.f32 %v1697, %v1697
    %v1788 = vmul.f32 %v1698, %v1698
    %v1789 = vmul.f32 %v1699, %v1699
    %v1790 = vmul.f32 %v1700, %v1700
    %v1791 = vmul.f32 %v1701, %v1701
    %v1792 = vmul.f32 %v1702, %v1702
    %v1793 = vmul.f32 %v1703, %v1703
    %v1794 = vsel %vm152, %v1776, 0.0
    %1795 = vadd.xlane.f32.xlu0 %v1794
    %v1796 = vpop.xlane.xlu0 %1795
    %v1797 = vsel %vm152, %v1777, 0.0
    %1798 = vadd.xlane.f32.xlu0 %v1797
    %v1799 = vpop.xlane.xlu0 %1798
    %v1800 = vsel %vm152, %v1778, 0.0
    %1801 = vadd.xlane.f32.xlu0 %v1800
    %v1802 = vpop.xlane.xlu0 %1801
    %v1803 = vsel %vm152, %v1779, 0.0
    %1804 = vadd.xlane.f32.xlu0 %v1803
    %v1805 = vpop.xlane.xlu0 %1804
    %v1806 = vsel %vm152, %v1780, 0.0
    %1807 = vadd.xlane.f32.xlu0 %v1806
    %v1808 = vpop.xlane.xlu0 %1807
    %v1809 = vsel %vm152, %v1781, 0.0
    %1810 = vadd.xlane.f32.xlu0 %v1809
    %v1811 = vpop.xlane.xlu0 %1810
    %v1812 = vsel %vm152, %v1782, 0.0
    %1813 = vadd.xlane.f32.xlu0 %v1812
    %v1814 = vpop.xlane.xlu0 %1813
    %v1815 = vsel %vm152, %v1783, 0.0
    %1816 = vadd.xlane.f32.xlu0 %v1815
    %v1817 = vpop.xlane.xlu0 %1816
    %v1818 = vsel %vm152, %v1784, 0.0
    %1819 = vadd.xlane.f32.xlu0 %v1818
    %v1820 = vpop.xlane.xlu0 %1819
    %v1821 = vsel %vm152, %v1785, 0.0
    %1822 = vadd.xlane.f32.xlu0 %v1821
    %v1823 = vpop.xlane.xlu0 %1822
    %v1824 = vsel %vm152, %v1786, 0.0
    %1825 = vadd.xlane.f32.xlu0 %v1824
    %v1826 = vpop.xlane.xlu0 %1825
    %v1827 = vsel %vm152, %v1787, 0.0
    %1828 = vadd.xlane.f32.xlu0 %v1827
    %v1829 = vpop.xlane.xlu0 %1828
    %v1830 = vsel %vm152, %v1788, 0.0
    %1831 = vadd.xlane.f32.xlu0 %v1830
    %v1832 = vpop.xlane.xlu0 %1831
    %v1833 = vsel %vm152, %v1789, 0.0
    %1834 = vadd.xlane.f32.xlu0 %v1833
    %v1835 = vpop.xlane.xlu0 %1834
    %v1836 = vsel %vm152, %v1790, 0.0
    %1837 = vadd.xlane.f32.xlu0 %v1836
    %v1838 = vpop.xlane.xlu0 %1837
    %v1839 = vsel %vm152, %v1791, 0.0
    %1840 = vadd.xlane.f32.xlu0 %v1839
    %v1841 = vpop.xlane.xlu0 %1840
    %v1842 = vsel %vm152, %v1792, 0.0
    %1843 = vadd.xlane.f32.xlu0 %v1842
    %v1844 = vpop.xlane.xlu0 %1843
    %v1845 = vsel %vm152, %v1793, 0.0
    %1846 = vadd.xlane.f32.xlu0 %v1845
    %v1847 = vpop.xlane.xlu0 %1846
    %v1848 = vmul.f32 %v1796, %v379
    %v1849 = vmul.f32 %v1799, %v379
    %v1850 = vmul.f32 %v1802, %v379
    %v1851 = vmul.f32 %v1805, %v379
    %v1852 = vmul.f32 %v1808, %v379
    %v1853 = vmul.f32 %v1811, %v379
    %v1854 = vmul.f32 %v1814, %v379
    %v1855 = vmul.f32 %v1817, %v379
    %v1856 = vmul.f32 %v1820, %v379
    %v1857 = vmul.f32 %v1823, %v379
    %v1858 = vmul.f32 %v1826, %v379
    %v1859 = vmul.f32 %v1829, %v379
    %v1860 = vmul.f32 %v1832, %v379
    %v1861 = vmul.f32 %v1835, %v379
    %v1862 = vmul.f32 %v1838, %v379
    %v1863 = vmul.f32 %v1841, %v379
    %v1864 = vmul.f32 %v1844, %v379
    %v1865 = vmul.f32 %v1847, %v379
    %v1866 = vmul.f32 %v1758, %v1758
    %v1867 = vmul.f32 %v1759, %v1759
    %v1868 = vmul.f32 %v1760, %v1760
    %v1869 = vmul.f32 %v1761, %v1761
    %v1870 = vmul.f32 %v1762, %v1762
    %v1871 = vmul.f32 %v1763, %v1763
    %v1872 = vmul.f32 %v1764, %v1764
    %v1873 = vmul.f32 %v1765, %v1765
    %v1874 = vmul.f32 %v1766, %v1766
    %v1875 = vmul.f32 %v1767, %v1767
    %v1876 = vmul.f32 %v1768, %v1768
    %v1877 = vmul.f32 %v1769, %v1769
    %v1878 = vmul.f32 %v1770, %v1770
    %v1879 = vmul.f32 %v1771, %v1771
    %v1880 = vmul.f32 %v1772, %v1772
    %v1881 = vmul.f32 %v1773, %v1773
    %v1882 = vmul.f32 %v1774, %v1774
    %v1883 = vmul.f32 %v1775, %v1775
    %v1884 = vsub.f32 %v1848, %v1866
    %v1885 = vsub.f32 %v1849, %v1867
    %v1886 = vsub.f32 %v1850, %v1868
    %v1887 = vsub.f32 %v1851, %v1869
    %v1888 = vsub.f32 %v1852, %v1870
    %v1889 = vsub.f32 %v1853, %v1871
    %v1890 = vsub.f32 %v1854, %v1872
    %v1891 = vsub.f32 %v1855, %v1873
    %v1892 = vsub.f32 %v1856, %v1874
    %v1893 = vsub.f32 %v1857, %v1875
    %v1894 = vsub.f32 %v1858, %v1876
    %v1895 = vsub.f32 %v1859, %v1877
    %v1896 = vsub.f32 %v1860, %v1878
    %v1897 = vsub.f32 %v1861, %v1879
    %v1898 = vsub.f32 %v1862, %v1880
    %v1899 = vsub.f32 %v1863, %v1881
    %v1900 = vsub.f32 %v1864, %v1882
    %v1901 = vsub.f32 %v1865, %v1883
    %v1902 = vsub.f32 %v1686, %v1758
    %v1903 = vsub.f32 %v1687, %v1759
    %v1904 = vsub.f32 %v1688, %v1760
    %v1905 = vsub.f32 %v1689, %v1761
    %v1906 = vsub.f32 %v1690, %v1762
    %v1907 = vsub.f32 %v1691, %v1763
    %v1908 = vsub.f32 %v1692, %v1764
    %v1909 = vsub.f32 %v1693, %v1765
    %v1910 = vsub.f32 %v1694, %v1766
    %v1911 = vsub.f32 %v1695, %v1767
    %v1912 = vsub.f32 %v1696, %v1768
    %v1913 = vsub.f32 %v1697, %v1769
    %v1914 = vsub.f32 %v1698, %v1770
    %v1915 = vsub.f32 %v1699, %v1771
    %v1916 = vsub.f32 %v1700, %v1772
    %v1917 = vsub.f32 %v1701, %v1773
    %v1918 = vsub.f32 %v1702, %v1774
    %v1919 = vsub.f32 %v1703, %v1775
    %v1920 = vadd.f32 %v1884, 1e-05
    %v1921 = vadd.f32 %v1885, 1e-05
    %v1922 = vadd.f32 %v1886, 1e-05
    %v1923 = vadd.f32 %v1887, 1e-05
    %v1924 = vadd.f32 %v1888, 1e-05
    %v1925 = vadd.f32 %v1889, 1e-05
    %v1926 = vadd.f32 %v1890, 1e-05
    %v1927 = vadd.f32 %v1891, 1e-05
    %v1928 = vadd.f32 %v1892, 1e-05
    %v1929 = vadd.f32 %v1893, 1e-05
    %v1930 = vadd.f32 %v1894, 1e-05
    %v1931 = vadd.f32 %v1895, 1e-05
    %v1932 = vadd.f32 %v1896, 1e-05
    %v1933 = vadd.f32 %v1897, 1e-05
    %v1934 = vadd.f32 %v1898, 1e-05
    %v1935 = vadd.f32 %v1899, 1e-05
    %v1936 = vadd.f32 %v1900, 1e-05
    %v1937 = vadd.f32 %v1901, 1e-05
    %v1938 = vrsqrt.pop %v1920
    %v1939 = vrsqrt.pop %v1921
    %v1940 = vrsqrt.pop %v1922
    %v1941 = vrsqrt.pop %v1923
    %v1942 = vrsqrt.pop %v1924
    %v1943 = vrsqrt.pop %v1925
    %v1944 = vrsqrt.pop %v1926
    %v1945 = vrsqrt.pop %v1927
    %v1946 = vrsqrt.pop %v1928
    %v1947 = vrsqrt.pop %v1929
    %v1948 = vrsqrt.pop %v1930
    %v1949 = vrsqrt.pop %v1931
    %v1950 = vrsqrt.pop %v1932
    %v1951 = vrsqrt.pop %v1933
    %v1952 = vrsqrt.pop %v1934
    %v1953 = vrsqrt.pop %v1935
    %v1954 = vrsqrt.pop %v1936
    %v1955 = vrsqrt.pop %v1937
    %v1956 = vmul.f32 %v1902, %v1938
    %v1957 = vmul.f32 %v1903, %v1939
    %v1958 = vmul.f32 %v1904, %v1940
    %v1959 = vmul.f32 %v1905, %v1941
    %v1960 = vmul.f32 %v1906, %v1942
    %v1961 = vmul.f32 %v1907, %v1943
    %v1962 = vmul.f32 %v1908, %v1944
    %v1963 = vmul.f32 %v1909, %v1945
    %v1964 = vmul.f32 %v1910, %v1946
    %v1965 = vmul.f32 %v1911, %v1947
    %v1966 = vmul.f32 %v1912, %v1948
    %v1967 = vmul.f32 %v1913, %v1949
    %v1968 = vmul.f32 %v1914, %v1950
    %v1969 = vmul.f32 %v1915, %v1951
    %v1970 = vmul.f32 %v1916, %v1952
    %v1971 = vmul.f32 %v1917, %v1953
    %v1972 = vmul.f32 %v1918, %v1954
    %v1973 = vmul.f32 %v1919, %v1955
    %v1974 = vlaneseq
    %v1975 = vshrl.u32 %v1974, 7
    %v1976 = vsub.s32 3, %v1975
    %v1977 = vrot.slane %v34, %v1976
    %v1978 = vmul.f32 %v1956, %v1977
    %v1979 = vmul.f32 %v1957, %v1977
    %v1980 = vmul.f32 %v1958, %v1977
    %v1981 = vmul.f32 %v1959, %v1977
    %v1982 = vmul.f32 %v1960, %v1977
    %v1983 = vmul.f32 %v1961, %v1977
    %v1984 = vmul.f32 %v1962, %v1977
    %v1985 = vmul.f32 %v1963, %v1977
    %v1986 = vmul.f32 %v1964, %v1977
    %v1987 = vmul.f32 %v1965, %v1977
    %v1988 = vmul.f32 %v1966, %v1977
    %v1989 = vmul.f32 %v1967, %v1977
    %v1990 = vmul.f32 %v1968, %v1977
    %v1991 = vmul.f32 %v1969, %v1977
    %v1992 = vmul.f32 %v1970, %v1977
    %v1993 = vmul.f32 %v1971, %v1977
    %v1994 = vmul.f32 %v1972, %v1977
    %v1995 = vmul.f32 %v1973, %v1977
    %v1996 = vlaneseq
    %v1997 = vshrl.u32 %v1996, 7
    %v1998 = vsub.s32 4, %v1997
    %v1999 = vrot.slane %v34, %v1998
    %v2000 = vadd.f32 %v1978, %v1999
    %v2001 = vadd.f32 %v1979, %v1999
    %v2002 = vadd.f32 %v1980, %v1999
    %v2003 = vadd.f32 %v1981, %v1999
    %v2004 = vadd.f32 %v1982, %v1999
    %v2005 = vadd.f32 %v1983, %v1999
    %v2006 = vadd.f32 %v1984, %v1999
    %v2007 = vadd.f32 %v1985, %v1999
    %v2008 = vadd.f32 %v1986, %v1999
    %v2009 = vadd.f32 %v1987, %v1999
    %v2010 = vadd.f32 %v1988, %v1999
    %v2011 = vadd.f32 %v1989, %v1999
    %v2012 = vadd.f32 %v1990, %v1999
    %v2013 = vadd.f32 %v1991, %v1999
    %v2014 = vadd.f32 %v1992, %v1999
    %v2015 = vadd.f32 %v1993, %v1999
    %v2016 = vadd.f32 %v1994, %v1999
    %v2017 = vadd.f32 %v1995, %v1999
    %v2018 = vpack.c.bf16 %v2001, %v2000
    %v2019 = vpack.c.bf16 %v2003, %v2002
    %v2020 = vpack.c.bf16 %v2005, %v2004
    %v2021 = vpack.c.bf16 %v2007, %v2006
    %v2022 = vpack.c.bf16 %v2009, %v2008
    %v2023 = vpack.c.bf16 %v2011, %v2010
    %v2024 = vpack.c.bf16 %v2013, %v2012
    %v2025 = vpack.c.bf16 %v2015, %v2014
    %v2026 = vpack.c.bf16 %v2017, %v2016
    %v2027 = vld [vmem:[%s3] sm:$0xf]
    %v2028 = vld [vmem:[%s3 + $0x4] sm:$0xf]
    %v2029 = vld [vmem:[%s3 + $0x8] sm:$0xf]
    %v2030 = vld [vmem:[%s3 + $0xc] sm:$0xf]
    %v2031 = vld [vmem:[%s3 + $0x10] sm:$0xf]
    %v2032 = vld [vmem:[%s3 + $0x14] sm:$0xf]
    %v2033 = vld [vmem:[%s3 + $0x18] sm:$0xf]
    %v2034 = vld [vmem:[%s3 + $0x1c] sm:$0x3]
    %v2035 = vlaneseq
    %v2036 = vshrl.u32 %v2035, 7
    %v2037 = vsub.s32 5, %v2036
    %v2038 = vrot.slane %v34, %v2037
    %v2047 = vunpack.c.l.b16 %v2027
    %v2048 = vunpack.c.l.b16 %v2028
    %v2049 = vunpack.c.l.b16 %v2029
    %v2050 = vunpack.c.l.b16 %v2030
    %v2051 = vunpack.c.l.b16 %v2031
    %v2052 = vunpack.c.l.b16 %v2032
    %v2053 = vunpack.c.l.b16 %v2033
    %v2054 = vunpack.c.l.b16 %v2034
    %v2055 = vpack.c.b16 %v2048, %v2047
    %v2056 = vpack.c.b16 %v2050, %v2049
    %v2057 = vpack.c.b16 %v2052, %v2051
    %v2058 = vpack.c.b16 %v2054, %v2053
    %v2063 = vsel %vm152, %v2018, 0
    %v2066 = vsel %vm152, %v2019, 0
    %v2069 = vsel %vm152, %v2020, 0
    %v2072 = vsel %vm152, %v2021, 0
    %v2075 = vsel %vm152, %v2022, 0
    %v2078 = vsel %vm152, %v2023, 0
    %v2081 = vsel %vm152, %v2024, 0
    %v2084 = vsel %vm152, %v2025, 0
    %v2087 = vsel %vm152, %v2026, 0
    %v2090 = vsel %vm180, %v2058, 0
    %2092 = vmatprep.subr.bf16.mxu0 0
    %2093 = vmatpush1.bf16.msra.mxu0 0
    %2094 = vmatprep.subr.bf16.mxu0 0
    %2095 = vmatpush1.bf16.msra.mxu0 0
    %2096 = vmatprep.subr.bf16.mxu0 0
    %2097 = vmatpush1.bf16.msra.mxu0 0
    %2098 = vmatprep.subr.bf16.mxu0 0
    %2099 = vmatpush1.bf16.msra.mxu0 0
    %2100 = vmatprep.subr.bf16.mxu0 0
    %2101 = vmatpush1.bf16.msra.mxu0 %v2090
    %2102 = vmatprep.subr.bf16.mxu0 0
    %2103 = vmatpush1.bf16.msra.mxu0 %v2057
    %2104 = vmatprep.subr.bf16.mxu0 0
    %2105 = vmatpush1.bf16.msra.mxu0 %v2056
    %2106 = vmatprep.subr.bf16.mxu0 0
    %2107 = vmatpush1.bf16.msra.mxu0 %v2055
    %2108 = vmatprep.subr.bf16.mxu0 0
    %2109 = vmatpush2.bf16.msra.mxu0 0
    %2110 = vmatprep.subr.bf16.mxu0 0
    %2111 = vmatpush2.bf16.msra.mxu0 0
    %2112 = vmatprep.subr.bf16.mxu0 0
    %2113 = vmatpush2.bf16.msra.mxu0 0
    %2114 = vmatprep.subr.bf16.mxu0 0
    %2115 = vmatpush2.bf16.msra.mxu0 0
    %2116 = vmatprep.subr.bf16.mxu0 0
    %2117 = vmatpush2.bf16.msra.mxu0 0
    %2118 = vmatprep.subr.bf16.mxu0 0
    %2119 = vmatpush2.bf16.msra.mxu0 0
    %2120 = vmatprep.subr.bf16.mxu0 0
    %2121 = vmatpush2.bf16.msra.mxu0 0
    %2122 = vmatprep.subr.bf16.mxu0 0
    %2123 = vmatpush2.bf16.msra.mxu0 0
    %2124 = vmatprep.mubr.bf16.mxu0 0
    %2125 = vmatmul.mubr.bf16.gmra.mxu0 %v2063
    %v2126 = vpop.f32.mrf.mxu0
    %v2127 = vadd.f32 %v2038, %v2126
    %v2128 = vpop.f32.mrf.mxu0
    %v2129 = vpop.f32.mrf.mxu0
    %v2130 = vadd.f32 %v2038, %v2129
    %v2131 = vpop.f32.mrf.mxu0
    %2132 = vmatprep.mubr.bf16.mxu0 0
    %2133 = vmatmul.mubr.bf16.gmra.mxu0 %v2066
    %v2134 = vpop.f32.mrf.mxu0
    %v2135 = vadd.f32 %v2038, %v2134
    %v2136 = vpop.f32.mrf.mxu0
    %v2137 = vpop.f32.mrf.mxu0
    %v2138 = vadd.f32 %v2038, %v2137
    %v2139 = vpop.f32.mrf.mxu0
    %2140 = vmatprep.mubr.bf16.mxu0 0
    %2141 = vmatmul.mubr.bf16.gmra.mxu0 %v2069
    %v2142 = vpop.f32.mrf.mxu0
    %v2143 = vadd.f32 %v2038, %v2142
    %v2144 = vpop.f32.mrf.mxu0
    %v2145 = vpop.f32.mrf.mxu0
    %v2146 = vadd.f32 %v2038, %v2145
    %v2147 = vpop.f32.mrf.mxu0
    %2148 = vmatprep.mubr.bf16.mxu0 0
    %2149 = vmatmul.mubr.bf16.gmra.mxu0 %v2072
    %v2150 = vpop.f32.mrf.mxu0
    %v2151 = vadd.f32 %v2038, %v2150
    %v2152 = vpop.f32.mrf.mxu0
    %v2153 = vpop.f32.mrf.mxu0
    %v2154 = vadd.f32 %v2038, %v2153
    %v2155 = vpop.f32.mrf.mxu0
    %2156 = vmatprep.mubr.bf16.mxu0 0
    %2157 = vmatmul.mubr.bf16.gmra.mxu0 %v2075
    %v2158 = vpop.f32.mrf.mxu0
    %v2159 = vadd.f32 %v2038, %v2158
    %v2160 = vpop.f32.mrf.mxu0
    %v2161 = vpop.f32.mrf.mxu0
    %v2162 = vadd.f32 %v2038, %v2161
    %v2163 = vpop.f32.mrf.mxu0
    %2164 = vmatprep.mubr.bf16.mxu0 0
    %2165 = vmatmul.mubr.bf16.gmra.mxu0 %v2078
    %v2166 = vpop.f32.mrf.mxu0
    %v2167 = vadd.f32 %v2038, %v2166
    %v2168 = vpop.f32.mrf.mxu0
    %v2169 = vpop.f32.mrf.mxu0
    %v2170 = vadd.f32 %v2038, %v2169
    %v2171 = vpop.f32.mrf.mxu0
    %2172 = vmatprep.mubr.bf16.mxu0 0
    %2173 = vmatmul.mubr.bf16.gmra.mxu0 %v2081
    %v2174 = vpop.f32.mrf.mxu0
    %v2175 = vadd.f32 %v2038, %v2174
    %v2176 = vpop.f32.mrf.mxu0
    %v2177 = vpop.f32.mrf.mxu0
    %v2178 = vadd.f32 %v2038, %v2177
    %v2179 = vpop.f32.mrf.mxu0
    %2180 = vmatprep.mubr.bf16.mxu0 0
    %2181 = vmatmul.mubr.bf16.gmra.mxu0 %v2084
    %v2182 = vpop.f32.mrf.mxu0
    %v2183 = vadd.f32 %v2038, %v2182
    %v2184 = vpop.f32.mrf.mxu0
    %v2185 = vpop.f32.mrf.mxu0
    %v2186 = vadd.f32 %v2038, %v2185
    %v2187 = vpop.f32.mrf.mxu0
    %2188 = vmatprep.mubr.bf16.mxu0 0
    %2189 = vmatmul.mubr.bf16.gmra.mxu0 %v2087
    %v2190 = vpop.f32.mrf.mxu0
    %v2191 = vadd.f32 %v2038, %v2190
    %v2192 = vpop.f32.mrf.mxu0
    %v2193 = vpop.f32.mrf.mxu0
    %v2194 = vadd.f32 %v2038, %v2193
    %v2195 = vpop.f32.mrf.mxu0
    %2196 = vdwg.mxu0
    %v2197 = vmul.f32 %v2127, 0.5
    %v2198 = vmul.f32 %v2130, 0.5
    %v2199 = vmul.f32 %v2135, 0.5
    %v2200 = vmul.f32 %v2138, 0.5
    %v2201 = vmul.f32 %v2143, 0.5
    %v2202 = vmul.f32 %v2146, 0.5
    %v2203 = vmul.f32 %v2151, 0.5
    %v2204 = vmul.f32 %v2154, 0.5
    %v2205 = vmul.f32 %v2159, 0.5
    %v2206 = vmul.f32 %v2162, 0.5
    %v2207 = vmul.f32 %v2167, 0.5
    %v2208 = vmul.f32 %v2170, 0.5
    %v2209 = vmul.f32 %v2175, 0.5
    %v2210 = vmul.f32 %v2178, 0.5
    %v2211 = vmul.f32 %v2183, 0.5
    %v2212 = vmul.f32 %v2186, 0.5
    %v2213 = vmul.f32 %v2191, 0.5
    %v2214 = vmul.f32 %v2194, 0.5
    %v2215 = vmul.f32 %v2127, 0.044715
    %v2216 = vmul.f32 %v2130, 0.044715
    %v2217 = vmul.f32 %v2135, 0.044715
    %v2218 = vmul.f32 %v2138, 0.044715
    %v2219 = vmul.f32 %v2143, 0.044715
    %v2220 = vmul.f32 %v2146, 0.044715
    %v2221 = vmul.f32 %v2151, 0.044715
    %v2222 = vmul.f32 %v2154, 0.044715
    %v2223 = vmul.f32 %v2159, 0.044715
    %v2224 = vmul.f32 %v2162, 0.044715
    %v2225 = vmul.f32 %v2167, 0.044715
    %v2226 = vmul.f32 %v2170, 0.044715
    %v2227 = vmul.f32 %v2175, 0.044715
    %v2228 = vmul.f32 %v2178, 0.044715
    %v2229 = vmul.f32 %v2183, 0.044715
    %v2230 = vmul.f32 %v2186, 0.044715
    %v2231 = vmul.f32 %v2191, 0.044715
    %v2232 = vmul.f32 %v2194, 0.044715
    %v2233 = vmul.f32 %v2215, %v2127
    %v2234 = vmul.f32 %v2216, %v2130
    %v2235 = vmul.f32 %v2217, %v2135
    %v2236 = vmul.f32 %v2218, %v2138
    %v2237 = vmul.f32 %v2219, %v2143
    %v2238 = vmul.f32 %v2220, %v2146
    %v2239 = vmul.f32 %v2221, %v2151
    %v2240 = vmul.f32 %v2222, %v2154
    %v2241 = vmul.f32 %v2223, %v2159
    %v2242 = vmul.f32 %v2224, %v2162
    %v2243 = vmul.f32 %v2225, %v2167
    %v2244 = vmul.f32 %v2226, %v2170
    %v2245 = vmul.f32 %v2227, %v2175
    %v2246 = vmul.f32 %v2228, %v2178
    %v2247 = vmul.f32 %v2229, %v2183
    %v2248 = vmul.f32 %v2230, %v2186
    %v2249 = vmul.f32 %v2231, %v2191
    %v2250 = vmul.f32 %v2232, %v2194
    %v2251 = vmul.f32 %v2233, %v2127
    %v2252 = vmul.f32 %v2234, %v2130
    %v2253 = vmul.f32 %v2235, %v2135
    %v2254 = vmul.f32 %v2236, %v2138
    %v2255 = vmul.f32 %v2237, %v2143
    %v2256 = vmul.f32 %v2238, %v2146
    %v2257 = vmul.f32 %v2239, %v2151
    %v2258 = vmul.f32 %v2240, %v2154
    %v2259 = vmul.f32 %v2241, %v2159
    %v2260 = vmul.f32 %v2242, %v2162
    %v2261 = vmul.f32 %v2243, %v2167
    %v2262 = vmul.f32 %v2244, %v2170
    %v2263 = vmul.f32 %v2245, %v2175
    %v2264 = vmul.f32 %v2246, %v2178
    %v2265 = vmul.f32 %v2247, %v2183
    %v2266 = vmul.f32 %v2248, %v2186
    %v2267 = vmul.f32 %v2249, %v2191
    %v2268 = vmul.f32 %v2250, %v2194
    %v2269 = vadd.f32 %v2127, %v2251
    %v2270 = vadd.f32 %v2130, %v2252
    %v2271 = vadd.f32 %v2135, %v2253
    %v2272 = vadd.f32 %v2138, %v2254
    %v2273 = vadd.f32 %v2143, %v2255
    %v2274 = vadd.f32 %v2146, %v2256
    %v2275 = vadd.f32 %v2151, %v2257
    %v2276 = vadd.f32 %v2154, %v2258
    %v2277 = vadd.f32 %v2159, %v2259
    %v2278 = vadd.f32 %v2162, %v2260
    %v2279 = vadd.f32 %v2167, %v2261
    %v2280 = vadd.f32 %v2170, %v2262
    %v2281 = vadd.f32 %v2175, %v2263
    %v2282 = vadd.f32 %v2178, %v2264
    %v2283 = vadd.f32 %v2183, %v2265
    %v2284 = vadd.f32 %v2186, %v2266
    %v2285 = vadd.f32 %v2191, %v2267
    %v2286 = vadd.f32 %v2194, %v2268
    %v2287 = vmul.f32 %v2269, 0.7978846
    %v2288 = vmul.f32 %v2270, 0.7978846
    %v2289 = vmul.f32 %v2271, 0.7978846
    %v2290 = vmul.f32 %v2272, 0.7978846
    %v2291 = vmul.f32 %v2273, 0.7978846
    %v2292 = vmul.f32 %v2274, 0.7978846
    %v2293 = vmul.f32 %v2275, 0.7978846
    %v2294 = vmul.f32 %v2276, 0.7978846
    %v2295 = vmul.f32 %v2277, 0.7978846
    %v2296 = vmul.f32 %v2278, 0.7978846
    %v2297 = vmul.f32 %v2279, 0.7978846
    %v2298 = vmul.f32 %v2280, 0.7978846
    %v2299 = vmul.f32 %v2281, 0.7978846
    %v2300 = vmul.f32 %v2282, 0.7978846
    %v2301 = vmul.f32 %v2283, 0.7978846
    %v2302 = vmul.f32 %v2284, 0.7978846
    %v2303 = vmul.f32 %v2285, 0.7978846
    %v2304 = vmul.f32 %v2286, 0.7978846
    %v2305 = vtanh.pop %v2287
    %v2306 = vtanh.pop %v2288
    %v2307 = vtanh.pop %v2289
    %v2308 = vtanh.pop %v2290
    %v2309 = vtanh.pop %v2291
    %v2310 = vtanh.pop %v2292
    %v2311 = vtanh.pop %v2293
    %v2312 = vtanh.pop %v2294
    %v2313 = vtanh.pop %v2295
    %v2314 = vtanh.pop %v2296
    %v2315 = vtanh.pop %v2297
    %v2316 = vtanh.pop %v2298
    %v2317 = vtanh.pop %v2299
    %v2318 = vtanh.pop %v2300
    %v2319 = vtanh.pop %v2301
    %v2320 = vtanh.pop %v2302
    %v2321 = vtanh.pop %v2303
    %v2322 = vtanh.pop %v2304
    %v2323 = vadd.f32 %v2305, 1.0
    %v2324 = vadd.f32 %v2306, 1.0
    %v2325 = vadd.f32 %v2307, 1.0
    %v2326 = vadd.f32 %v2308, 1.0
    %v2327 = vadd.f32 %v2309, 1.0
    %v2328 = vadd.f32 %v2310, 1.0
    %v2329 = vadd.f32 %v2311, 1.0
    %v2330 = vadd.f32 %v2312, 1.0
    %v2331 = vadd.f32 %v2313, 1.0
    %v2332 = vadd.f32 %v2314, 1.0
    %v2333 = vadd.f32 %v2315, 1.0
    %v2334 = vadd.f32 %v2316, 1.0
    %v2335 = vadd.f32 %v2317, 1.0
    %v2336 = vadd.f32 %v2318, 1.0
    %v2337 = vadd.f32 %v2319, 1.0
    %v2338 = vadd.f32 %v2320, 1.0
    %v2339 = vadd.f32 %v2321, 1.0
    %v2340 = vadd.f32 %v2322, 1.0
    %v2341 = vmul.f32 %v2197, %v2323
    %v2342 = vmul.f32 %v2198, %v2324
    %v2343 = vmul.f32 %v2199, %v2325
    %v2344 = vmul.f32 %v2200, %v2326
    %v2345 = vmul.f32 %v2201, %v2327
    %v2346 = vmul.f32 %v2202, %v2328
    %v2347 = vmul.f32 %v2203, %v2329
    %v2348 = vmul.f32 %v2204, %v2330
    %v2349 = vmul.f32 %v2205, %v2331
    %v2350 = vmul.f32 %v2206, %v2332
    %v2351 = vmul.f32 %v2207, %v2333
    %v2352 = vmul.f32 %v2208, %v2334
    %v2353 = vmul.f32 %v2209, %v2335
    %v2354 = vmul.f32 %v2210, %v2336
    %v2355 = vmul.f32 %v2211, %v2337
    %v2356 = vmul.f32 %v2212, %v2338
    %v2357 = vmul.f32 %v2213, %v2339
    %v2358 = vmul.f32 %v2214, %v2340
    %v2359 = vpack.c.bf16 %v2342, %v2341
    %v2360 = vpack.c.bf16 %v2344, %v2343
    %v2361 = vpack.c.bf16 %v2346, %v2345
    %v2362 = vpack.c.bf16 %v2348, %v2347
    %v2363 = vpack.c.bf16 %v2350, %v2349
    %v2364 = vpack.c.bf16 %v2352, %v2351
    %v2365 = vpack.c.bf16 %v2354, %v2353
    %v2366 = vpack.c.bf16 %v2356, %v2355
    %v2367 = vpack.c.bf16 %v2358, %v2357
    %v2368 = vld [vmem:[%s4] sm:$0xf]
    %v2369 = vld [vmem:[%s4 + $0x4] sm:$0xf]
    %v2370 = vld [vmem:[%s4 + $0x8] sm:$0xf]
    %v2371 = vld [vmem:[%s4 + $0xc] sm:$0xf]
    %v2372 = vld [vmem:[%s4 + $0x10] sm:$0xf]
    %v2373 = vld [vmem:[%s4 + $0x14] sm:$0xf]
    %v2374 = vld [vmem:[%s4 + $0x18] sm:$0xf]
    %v2375 = vld [vmem:[%s4 + $0x1c] sm:$0x3]
    %v2376 = vlaneseq
    %v2377 = vshrl.u32 %v2376, 7
    %v2378 = vsub.s32 6, %v2377
    %v2379 = vrot.slane %v34, %v2378
    %v2388 = vunpack.c.l.b16 %v2368
    %v2389 = vunpack.c.l.b16 %v2369
    %v2390 = vunpack.c.l.b16 %v2370
    %v2391 = vunpack.c.l.b16 %v2371
    %v2392 = vunpack.c.l.b16 %v2372
    %v2393 = vunpack.c.l.b16 %v2373
    %v2394 = vunpack.c.l.b16 %v2374
    %v2395 = vunpack.c.l.b16 %v2375
    %v2396 = vpack.c.b16 %v2389, %v2388
    %v2397 = vpack.c.b16 %v2391, %v2390
    %v2398 = vpack.c.b16 %v2393, %v2392
    %v2399 = vpack.c.b16 %v2395, %v2394
    %v2404 = vsel %vm152, %v2359, 0
    %v2407 = vsel %vm152, %v2360, 0
    %v2410 = vsel %vm152, %v2361, 0
    %v2413 = vsel %vm152, %v2362, 0
    %v2416 = vsel %vm152, %v2363, 0
    %v2419 = vsel %vm152, %v2364, 0
    %v2422 = vsel %vm152, %v2365, 0
    %v2425 = vsel %vm152, %v2366, 0
    %v2428 = vsel %vm152, %v2367, 0
    %v2431 = vsel %vm180, %v2399, 0
    %2433 = vmatprep.subr.bf16.mxu0 0
    %2434 = vmatpush1.bf16.msra.mxu0 0
    %2435 = vmatprep.subr.bf16.mxu0 0
    %2436 = vmatpush1.bf16.msra.mxu0 0
    %2437 = vmatprep.subr.bf16.mxu0 0
    %2438 = vmatpush1.bf16.msra.mxu0 0
    %2439 = vmatprep.subr.bf16.mxu0 0
    %2440 = vmatpush1.bf16.msra.mxu0 0
    %2441 = vmatprep.subr.bf16.mxu0 0
    %2442 = vmatpush1.bf16.msra.mxu0 %v2431
    %2443 = vmatprep.subr.bf16.mxu0 0
    %2444 = vmatpush1.bf16.msra.mxu0 %v2398
    %2445 = vmatprep.subr.bf16.mxu0 0
    %2446 = vmatpush1.bf16.msra.mxu0 %v2397
    %2447 = vmatprep.subr.bf16.mxu0 0
    %2448 = vmatpush1.bf16.msra.mxu0 %v2396
    %2449 = vmatprep.subr.bf16.mxu0 0
    %2450 = vmatpush2.bf16.msra.mxu0 0
    %2451 = vmatprep.subr.bf16.mxu0 0
    %2452 = vmatpush2.bf16.msra.mxu0 0
    %2453 = vmatprep.subr.bf16.mxu0 0
    %2454 = vmatpush2.bf16.msra.mxu0 0
    %2455 = vmatprep.subr.bf16.mxu0 0
    %2456 = vmatpush2.bf16.msra.mxu0 0
    %2457 = vmatprep.subr.bf16.mxu0 0
    %2458 = vmatpush2.bf16.msra.mxu0 0
    %2459 = vmatprep.subr.bf16.mxu0 0
    %2460 = vmatpush2.bf16.msra.mxu0 0
    %2461 = vmatprep.subr.bf16.mxu0 0
    %2462 = vmatpush2.bf16.msra.mxu0 0
    %2463 = vmatprep.subr.bf16.mxu0 0
    %2464 = vmatpush2.bf16.msra.mxu0 0
    %2465 = vmatprep.mubr.bf16.mxu0 0
    %2466 = vmatmul.mubr.bf16.gmra.mxu0 %v2404
    %v2467 = vpop.f32.mrf.mxu0
    %v2468 = vadd.f32 %v2379, %v2467
    %v2469 = vpop.f32.mrf.mxu0
    %v2470 = vpop.f32.mrf.mxu0
    %v2471 = vadd.f32 %v2379, %v2470
    %v2472 = vpop.f32.mrf.mxu0
    %2473 = vmatprep.mubr.bf16.mxu0 0
    %2474 = vmatmul.mubr.bf16.gmra.mxu0 %v2407
    %v2475 = vpop.f32.mrf.mxu0
    %v2476 = vadd.f32 %v2379, %v2475
    %v2477 = vpop.f32.mrf.mxu0
    %v2478 = vpop.f32.mrf.mxu0
    %v2479 = vadd.f32 %v2379, %v2478
    %v2480 = vpop.f32.mrf.mxu0
    %2481 = vmatprep.mubr.bf16.mxu0 0
    %2482 = vmatmul.mubr.bf16.gmra.mxu0 %v2410
    %v2483 = vpop.f32.mrf.mxu0
    %v2484 = vadd.f32 %v2379, %v2483
    %v2485 = vpop.f32.mrf.mxu0
    %v2486 = vpop.f32.mrf.mxu0
    %v2487 = vadd.f32 %v2379, %v2486
    %v2488 = vpop.f32.mrf.mxu0
    %2489 = vmatprep.mubr.bf16.mxu0 0
    %2490 = vmatmul.mubr.bf16.gmra.mxu0 %v2413
    %v2491 = vpop.f32.mrf.mxu0
    %v2492 = vadd.f32 %v2379, %v2491
    %v2493 = vpop.f32.mrf.mxu0
    %v2494 = vpop.f32.mrf.mxu0
    %v2495 = vadd.f32 %v2379, %v2494
    %v2496 = vpop.f32.mrf.mxu0
    %2497 = vmatprep.mubr.bf16.mxu0 0
    %2498 = vmatmul.mubr.bf16.gmra.mxu0 %v2416
    %v2499 = vpop.f32.mrf.mxu0
    %v2500 = vadd.f32 %v2379, %v2499
    %v2501 = vpop.f32.mrf.mxu0
    %v2502 = vpop.f32.mrf.mxu0
    %v2503 = vadd.f32 %v2379, %v2502
    %v2504 = vpop.f32.mrf.mxu0
    %2505 = vmatprep.mubr.bf16.mxu0 0
    %2506 = vmatmul.mubr.bf16.gmra.mxu0 %v2419
    %v2507 = vpop.f32.mrf.mxu0
    %v2508 = vadd.f32 %v2379, %v2507
    %v2509 = vpop.f32.mrf.mxu0
    %v2510 = vpop.f32.mrf.mxu0
    %v2511 = vadd.f32 %v2379, %v2510
    %v2512 = vpop.f32.mrf.mxu0
    %2513 = vmatprep.mubr.bf16.mxu0 0
    %2514 = vmatmul.mubr.bf16.gmra.mxu0 %v2422
    %v2515 = vpop.f32.mrf.mxu0
    %v2516 = vadd.f32 %v2379, %v2515
    %v2517 = vpop.f32.mrf.mxu0
    %v2518 = vpop.f32.mrf.mxu0
    %v2519 = vadd.f32 %v2379, %v2518
    %v2520 = vpop.f32.mrf.mxu0
    %2521 = vmatprep.mubr.bf16.mxu0 0
    %2522 = vmatmul.mubr.bf16.gmra.mxu0 %v2425
    %v2523 = vpop.f32.mrf.mxu0
    %v2524 = vadd.f32 %v2379, %v2523
    %v2525 = vpop.f32.mrf.mxu0
    %v2526 = vpop.f32.mrf.mxu0
    %v2527 = vadd.f32 %v2379, %v2526
    %v2528 = vpop.f32.mrf.mxu0
    %2529 = vmatprep.mubr.bf16.mxu0 0
    %2530 = vmatmul.mubr.bf16.gmra.mxu0 %v2428
    %v2531 = vpop.f32.mrf.mxu0
    %v2532 = vadd.f32 %v2379, %v2531
    %v2533 = vpop.f32.mrf.mxu0
    %v2534 = vpop.f32.mrf.mxu0
    %v2535 = vadd.f32 %v2379, %v2534
    %v2536 = vpop.f32.mrf.mxu0
    %2537 = vdwg.mxu0
    %v2538 = vadd.f32 %v1686, %v2468
    %v2539 = vadd.f32 %v1687, %v2471
    %v2540 = vadd.f32 %v1688, %v2476
    %v2541 = vadd.f32 %v1689, %v2479
    %v2542 = vadd.f32 %v1690, %v2484
    %v2543 = vadd.f32 %v1691, %v2487
    %v2544 = vadd.f32 %v1692, %v2492
    %v2545 = vadd.f32 %v1693, %v2495
    %v2546 = vadd.f32 %v1694, %v2500
    %v2547 = vadd.f32 %v1695, %v2503
    %v2548 = vadd.f32 %v1696, %v2508
    %v2549 = vadd.f32 %v1697, %v2511
    %v2550 = vadd.f32 %v1698, %v2516
    %v2551 = vadd.f32 %v1699, %v2519
    %v2552 = vadd.f32 %v1700, %v2524
    %v2553 = vadd.f32 %v1701, %v2527
    %v2554 = vadd.f32 %v1702, %v2532
    %v2555 = vadd.f32 %v1703, %v2535
    %v2556 = vsel %vm152, %v2538, 0.0
    %2557 = vadd.xlane.f32.xlu0 %v2556
    %v2558 = vpop.xlane.xlu0 %2557
    %v2559 = vsel %vm152, %v2539, 0.0
    %2560 = vadd.xlane.f32.xlu0 %v2559
    %v2561 = vpop.xlane.xlu0 %2560
    %v2562 = vsel %vm152, %v2540, 0.0
    %2563 = vadd.xlane.f32.xlu0 %v2562
    %v2564 = vpop.xlane.xlu0 %2563
    %v2565 = vsel %vm152, %v2541, 0.0
    %2566 = vadd.xlane.f32.xlu0 %v2565
    %v2567 = vpop.xlane.xlu0 %2566
    %v2568 = vsel %vm152, %v2542, 0.0
    %2569 = vadd.xlane.f32.xlu0 %v2568
    %v2570 = vpop.xlane.xlu0 %2569
    %v2571 = vsel %vm152, %v2543, 0.0
    %2572 = vadd.xlane.f32.xlu0 %v2571
    %v2573 = vpop.xlane.xlu0 %2572
    %v2574 = vsel %vm152, %v2544, 0.0
    %2575 = vadd.xlane.f32.xlu0 %v2574
    %v2576 = vpop.xlane.xlu0 %2575
    %v2577 = vsel %vm152, %v2545, 0.0
    %2578 = vadd.xlane.f32.xlu0 %v2577
    %v2579 = vpop.xlane.xlu0 %2578
    %v2580 = vsel %vm152, %v2546, 0.0
    %2581 = vadd.xlane.f32.xlu0 %v2580
    %v2582 = vpop.xlane.xlu0 %2581
    %v2583 = vsel %vm152, %v2547, 0.0
    %2584 = vadd.xlane.f32.xlu0 %v2583
    %v2585 = vpop.xlane.xlu0 %2584
    %v2586 = vsel %vm152, %v2548, 0.0
    %2587 = vadd.xlane.f32.xlu0 %v2586
    %v2588 = vpop.xlane.xlu0 %2587
    %v2589 = vsel %vm152, %v2549, 0.0
    %2590 = vadd.xlane.f32.xlu0 %v2589
    %v2591 = vpop.xlane.xlu0 %2590
    %v2592 = vsel %vm152, %v2550, 0.0
    %2593 = vadd.xlane.f32.xlu0 %v2592
    %v2594 = vpop.xlane.xlu0 %2593
    %v2595 = vsel %vm152, %v2551, 0.0
    %2596 = vadd.xlane.f32.xlu0 %v2595
    %v2597 = vpop.xlane.xlu0 %2596
    %v2598 = vsel %vm152, %v2552, 0.0
    %2599 = vadd.xlane.f32.xlu0 %v2598
    %v2600 = vpop.xlane.xlu0 %2599
    %v2601 = vsel %vm152, %v2553, 0.0
    %2602 = vadd.xlane.f32.xlu0 %v2601
    %v2603 = vpop.xlane.xlu0 %2602
    %v2604 = vsel %vm152, %v2554, 0.0
    %2605 = vadd.xlane.f32.xlu0 %v2604
    %v2606 = vpop.xlane.xlu0 %2605
    %v2607 = vsel %vm152, %v2555, 0.0
    %2608 = vadd.xlane.f32.xlu0 %v2607
    %v2609 = vpop.xlane.xlu0 %2608
    %v2610 = vmul.f32 %v2558, %v379
    %v2611 = vmul.f32 %v2561, %v379
    %v2612 = vmul.f32 %v2564, %v379
    %v2613 = vmul.f32 %v2567, %v379
    %v2614 = vmul.f32 %v2570, %v379
    %v2615 = vmul.f32 %v2573, %v379
    %v2616 = vmul.f32 %v2576, %v379
    %v2617 = vmul.f32 %v2579, %v379
    %v2618 = vmul.f32 %v2582, %v379
    %v2619 = vmul.f32 %v2585, %v379
    %v2620 = vmul.f32 %v2588, %v379
    %v2621 = vmul.f32 %v2591, %v379
    %v2622 = vmul.f32 %v2594, %v379
    %v2623 = vmul.f32 %v2597, %v379
    %v2624 = vmul.f32 %v2600, %v379
    %v2625 = vmul.f32 %v2603, %v379
    %v2626 = vmul.f32 %v2606, %v379
    %v2627 = vmul.f32 %v2609, %v379
    %v2628 = vmul.f32 %v2538, %v2538
    %v2629 = vmul.f32 %v2539, %v2539
    %v2630 = vmul.f32 %v2540, %v2540
    %v2631 = vmul.f32 %v2541, %v2541
    %v2632 = vmul.f32 %v2542, %v2542
    %v2633 = vmul.f32 %v2543, %v2543
    %v2634 = vmul.f32 %v2544, %v2544
    %v2635 = vmul.f32 %v2545, %v2545
    %v2636 = vmul.f32 %v2546, %v2546
    %v2637 = vmul.f32 %v2547, %v2547
    %v2638 = vmul.f32 %v2548, %v2548
    %v2639 = vmul.f32 %v2549, %v2549
    %v2640 = vmul.f32 %v2550, %v2550
    %v2641 = vmul.f32 %v2551, %v2551
    %v2642 = vmul.f32 %v2552, %v2552
    %v2643 = vmul.f32 %v2553, %v2553
    %v2644 = vmul.f32 %v2554, %v2554
    %v2645 = vmul.f32 %v2555, %v2555
    %v2646 = vsel %vm152, %v2628, 0.0
    %2647 = vadd.xlane.f32.xlu0 %v2646
    %v2648 = vpop.xlane.xlu0 %2647
    %v2649 = vsel %vm152, %v2629, 0.0
    %2650 = vadd.xlane.f32.xlu0 %v2649
    %v2651 = vpop.xlane.xlu0 %2650
    %v2652 = vsel %vm152, %v2630, 0.0
    %2653 = vadd.xlane.f32.xlu0 %v2652
    %v2654 = vpop.xlane.xlu0 %2653
    %v2655 = vsel %vm152, %v2631, 0.0
    %2656 = vadd.xlane.f32.xlu0 %v2655
    %v2657 = vpop.xlane.xlu0 %2656
    %v2658 = vsel %vm152, %v2632, 0.0
    %2659 = vadd.xlane.f32.xlu0 %v2658
    %v2660 = vpop.xlane.xlu0 %2659
    %v2661 = vsel %vm152, %v2633, 0.0
    %2662 = vadd.xlane.f32.xlu0 %v2661
    %v2663 = vpop.xlane.xlu0 %2662
    %v2664 = vsel %vm152, %v2634, 0.0
    %2665 = vadd.xlane.f32.xlu0 %v2664
    %v2666 = vpop.xlane.xlu0 %2665
    %v2667 = vsel %vm152, %v2635, 0.0
    %2668 = vadd.xlane.f32.xlu0 %v2667
    %v2669 = vpop.xlane.xlu0 %2668
    %v2670 = vsel %vm152, %v2636, 0.0
    %2671 = vadd.xlane.f32.xlu0 %v2670
    %v2672 = vpop.xlane.xlu0 %2671
    %v2673 = vsel %vm152, %v2637, 0.0
    %2674 = vadd.xlane.f32.xlu0 %v2673
    %v2675 = vpop.xlane.xlu0 %2674
    %v2676 = vsel %vm152, %v2638, 0.0
    %2677 = vadd.xlane.f32.xlu0 %v2676
    %v2678 = vpop.xlane.xlu0 %2677
    %v2679 = vsel %vm152, %v2639, 0.0
    %2680 = vadd.xlane.f32.xlu0 %v2679
    %v2681 = vpop.xlane.xlu0 %2680
    %v2682 = vsel %vm152, %v2640, 0.0
    %2683 = vadd.xlane.f32.xlu0 %v2682
    %v2684 = vpop.xlane.xlu0 %2683
    %v2685 = vsel %vm152, %v2641, 0.0
    %2686 = vadd.xlane.f32.xlu0 %v2685
    %v2687 = vpop.xlane.xlu0 %2686
    %v2688 = vsel %vm152, %v2642, 0.0
    %2689 = vadd.xlane.f32.xlu0 %v2688
    %v2690 = vpop.xlane.xlu0 %2689
    %v2691 = vsel %vm152, %v2643, 0.0
    %2692 = vadd.xlane.f32.xlu0 %v2691
    %v2693 = vpop.xlane.xlu0 %2692
    %v2694 = vsel %vm152, %v2644, 0.0
    %2695 = vadd.xlane.f32.xlu0 %v2694
    %v2696 = vpop.xlane.xlu0 %2695
    %v2697 = vsel %vm152, %v2645, 0.0
    %2698 = vadd.xlane.f32.xlu0 %v2697
    %v2699 = vpop.xlane.xlu0 %2698
    %v2700 = vmul.f32 %v2648, %v379
    %v2701 = vmul.f32 %v2651, %v379
    %v2702 = vmul.f32 %v2654, %v379
    %v2703 = vmul.f32 %v2657, %v379
    %v2704 = vmul.f32 %v2660, %v379
    %v2705 = vmul.f32 %v2663, %v379
    %v2706 = vmul.f32 %v2666, %v379
    %v2707 = vmul.f32 %v2669, %v379
    %v2708 = vmul.f32 %v2672, %v379
    %v2709 = vmul.f32 %v2675, %v379
    %v2710 = vmul.f32 %v2678, %v379
    %v2711 = vmul.f32 %v2681, %v379
    %v2712 = vmul.f32 %v2684, %v379
    %v2713 = vmul.f32 %v2687, %v379
    %v2714 = vmul.f32 %v2690, %v379
    %v2715 = vmul.f32 %v2693, %v379
    %v2716 = vmul.f32 %v2696, %v379
    %v2717 = vmul.f32 %v2699, %v379
    %v2718 = vmul.f32 %v2610, %v2610
    %v2719 = vmul.f32 %v2611, %v2611
    %v2720 = vmul.f32 %v2612, %v2612
    %v2721 = vmul.f32 %v2613, %v2613
    %v2722 = vmul.f32 %v2614, %v2614
    %v2723 = vmul.f32 %v2615, %v2615
    %v2724 = vmul.f32 %v2616, %v2616
    %v2725 = vmul.f32 %v2617, %v2617
    %v2726 = vmul.f32 %v2618, %v2618
    %v2727 = vmul.f32 %v2619, %v2619
    %v2728 = vmul.f32 %v2620, %v2620
    %v2729 = vmul.f32 %v2621, %v2621
    %v2730 = vmul.f32 %v2622, %v2622
    %v2731 = vmul.f32 %v2623, %v2623
    %v2732 = vmul.f32 %v2624, %v2624
    %v2733 = vmul.f32 %v2625, %v2625
    %v2734 = vmul.f32 %v2626, %v2626
    %v2735 = vmul.f32 %v2627, %v2627
    %v2736 = vsub.f32 %v2700, %v2718
    %v2737 = vsub.f32 %v2701, %v2719
    %v2738 = vsub.f32 %v2702, %v2720
    %v2739 = vsub.f32 %v2703, %v2721
    %v2740 = vsub.f32 %v2704, %v2722
    %v2741 = vsub.f32 %v2705, %v2723
    %v2742 = vsub.f32 %v2706, %v2724
    %v2743 = vsub.f32 %v2707, %v2725
    %v2744 = vsub.f32 %v2708, %v2726
    %v2745 = vsub.f32 %v2709, %v2727
    %v2746 = vsub.f32 %v2710, %v2728
    %v2747 = vsub.f32 %v2711, %v2729
    %v2748 = vsub.f32 %v2712, %v2730
    %v2749 = vsub.f32 %v2713, %v2731
    %v2750 = vsub.f32 %v2714, %v2732
    %v2751 = vsub.f32 %v2715, %v2733
    %v2752 = vsub.f32 %v2716, %v2734
    %v2753 = vsub.f32 %v2717, %v2735
    %v2754 = vsub.f32 %v2538, %v2610
    %v2755 = vsub.f32 %v2539, %v2611
    %v2756 = vsub.f32 %v2540, %v2612
    %v2757 = vsub.f32 %v2541, %v2613
    %v2758 = vsub.f32 %v2542, %v2614
    %v2759 = vsub.f32 %v2543, %v2615
    %v2760 = vsub.f32 %v2544, %v2616
    %v2761 = vsub.f32 %v2545, %v2617
    %v2762 = vsub.f32 %v2546, %v2618
    %v2763 = vsub.f32 %v2547, %v2619
    %v2764 = vsub.f32 %v2548, %v2620
    %v2765 = vsub.f32 %v2549, %v2621
    %v2766 = vsub.f32 %v2550, %v2622
    %v2767 = vsub.f32 %v2551, %v2623
    %v2768 = vsub.f32 %v2552, %v2624
    %v2769 = vsub.f32 %v2553, %v2625
    %v2770 = vsub.f32 %v2554, %v2626
    %v2771 = vsub.f32 %v2555, %v2627
    %v2772 = vadd.f32 %v2736, 1e-05
    %v2773 = vadd.f32 %v2737, 1e-05
    %v2774 = vadd.f32 %v2738, 1e-05
    %v2775 = vadd.f32 %v2739, 1e-05
    %v2776 = vadd.f32 %v2740, 1e-05
    %v2777 = vadd.f32 %v2741, 1e-05
    %v2778 = vadd.f32 %v2742, 1e-05
    %v2779 = vadd.f32 %v2743, 1e-05
    %v2780 = vadd.f32 %v2744, 1e-05
    %v2781 = vadd.f32 %v2745, 1e-05
    %v2782 = vadd.f32 %v2746, 1e-05
    %v2783 = vadd.f32 %v2747, 1e-05
    %v2784 = vadd.f32 %v2748, 1e-05
    %v2785 = vadd.f32 %v2749, 1e-05
    %v2786 = vadd.f32 %v2750, 1e-05
    %v2787 = vadd.f32 %v2751, 1e-05
    %v2788 = vadd.f32 %v2752, 1e-05
    %v2789 = vadd.f32 %v2753, 1e-05
    %v2790 = vrsqrt.pop %v2772
    %v2791 = vrsqrt.pop %v2773
    %v2792 = vrsqrt.pop %v2774
    %v2793 = vrsqrt.pop %v2775
    %v2794 = vrsqrt.pop %v2776
    %v2795 = vrsqrt.pop %v2777
    %v2796 = vrsqrt.pop %v2778
    %v2797 = vrsqrt.pop %v2779
    %v2798 = vrsqrt.pop %v2780
    %v2799 = vrsqrt.pop %v2781
    %v2800 = vrsqrt.pop %v2782
    %v2801 = vrsqrt.pop %v2783
    %v2802 = vrsqrt.pop %v2784
    %v2803 = vrsqrt.pop %v2785
    %v2804 = vrsqrt.pop %v2786
    %v2805 = vrsqrt.pop %v2787
    %v2806 = vrsqrt.pop %v2788
    %v2807 = vrsqrt.pop %v2789
    %v2808 = vmul.f32 %v2754, %v2790
    %v2809 = vmul.f32 %v2755, %v2791
    %v2810 = vmul.f32 %v2756, %v2792
    %v2811 = vmul.f32 %v2757, %v2793
    %v2812 = vmul.f32 %v2758, %v2794
    %v2813 = vmul.f32 %v2759, %v2795
    %v2814 = vmul.f32 %v2760, %v2796
    %v2815 = vmul.f32 %v2761, %v2797
    %v2816 = vmul.f32 %v2762, %v2798
    %v2817 = vmul.f32 %v2763, %v2799
    %v2818 = vmul.f32 %v2764, %v2800
    %v2819 = vmul.f32 %v2765, %v2801
    %v2820 = vmul.f32 %v2766, %v2802
    %v2821 = vmul.f32 %v2767, %v2803
    %v2822 = vmul.f32 %v2768, %v2804
    %v2823 = vmul.f32 %v2769, %v2805
    %v2824 = vmul.f32 %v2770, %v2806
    %v2825 = vmul.f32 %v2771, %v2807
    %v2826 = vlaneseq
    %v2827 = vshrl.u32 %v2826, 7
    %v2828 = vsub.s32 7, %v2827
    %v2829 = vrot.slane %v34, %v2828
    %v2830 = vmul.f32 %v2808, %v2829
    %v2831 = vmul.f32 %v2809, %v2829
    %v2832 = vmul.f32 %v2810, %v2829
    %v2833 = vmul.f32 %v2811, %v2829
    %v2834 = vmul.f32 %v2812, %v2829
    %v2835 = vmul.f32 %v2813, %v2829
    %v2836 = vmul.f32 %v2814, %v2829
    %v2837 = vmul.f32 %v2815, %v2829
    %v2838 = vmul.f32 %v2816, %v2829
    %v2839 = vmul.f32 %v2817, %v2829
    %v2840 = vmul.f32 %v2818, %v2829
    %v2841 = vmul.f32 %v2819, %v2829
    %v2842 = vmul.f32 %v2820, %v2829
    %v2843 = vmul.f32 %v2821, %v2829
    %v2844 = vmul.f32 %v2822, %v2829
    %v2845 = vmul.f32 %v2823, %v2829
    %v2846 = vmul.f32 %v2824, %v2829
    %v2847 = vmul.f32 %v2825, %v2829
    %v2848 = vlaneseq
    %v2849 = vshrl.u32 %v2848, 7
    %v2850 = vsub.s32 0, %v2849
    %v2851 = vrot.slane %v35, %v2850
    %v2852 = vadd.f32 %v2830, %v2851
    %v2853 = vadd.f32 %v2831, %v2851
    %v2854 = vadd.f32 %v2832, %v2851
    %v2855 = vadd.f32 %v2833, %v2851
    %v2856 = vadd.f32 %v2834, %v2851
    %v2857 = vadd.f32 %v2835, %v2851
    %v2858 = vadd.f32 %v2836, %v2851
    %v2859 = vadd.f32 %v2837, %v2851
    %v2860 = vadd.f32 %v2838, %v2851
    %v2861 = vadd.f32 %v2839, %v2851
    %v2862 = vadd.f32 %v2840, %v2851
    %v2863 = vadd.f32 %v2841, %v2851
    %v2864 = vadd.f32 %v2842, %v2851
    %v2865 = vadd.f32 %v2843, %v2851
    %v2866 = vadd.f32 %v2844, %v2851
    %v2867 = vadd.f32 %v2845, %v2851
    %v2868 = vadd.f32 %v2846, %v2851
    %v2869 = vadd.f32 %v2847, %v2851
    %v2870 = vsel %vm152, %v2852, -inf
    %2871 = vmax.xlane.f32.xlu0 %v2870
    %v2872 = vpop.xlane.xlu0 %2871
    %v2873 = vsel %vm152, %v2853, -inf
    %2874 = vmax.xlane.f32.xlu0 %v2873
    %v2875 = vpop.xlane.xlu0 %2874
    %v2876 = vsel %vm152, %v2854, -inf
    %2877 = vmax.xlane.f32.xlu0 %v2876
    %v2878 = vpop.xlane.xlu0 %2877
    %v2879 = vsel %vm152, %v2855, -inf
    %2880 = vmax.xlane.f32.xlu0 %v2879
    %v2881 = vpop.xlane.xlu0 %2880
    %v2882 = vsel %vm152, %v2856, -inf
    %2883 = vmax.xlane.f32.xlu0 %v2882
    %v2884 = vpop.xlane.xlu0 %2883
    %v2885 = vsel %vm152, %v2857, -inf
    %2886 = vmax.xlane.f32.xlu0 %v2885
    %v2887 = vpop.xlane.xlu0 %2886
    %v2888 = vsel %vm152, %v2858, -inf
    %2889 = vmax.xlane.f32.xlu0 %v2888
    %v2890 = vpop.xlane.xlu0 %2889
    %v2891 = vsel %vm152, %v2859, -inf
    %2892 = vmax.xlane.f32.xlu0 %v2891
    %v2893 = vpop.xlane.xlu0 %2892
    %v2894 = vsel %vm152, %v2860, -inf
    %2895 = vmax.xlane.f32.xlu0 %v2894
    %v2896 = vpop.xlane.xlu0 %2895
    %v2897 = vsel %vm152, %v2861, -inf
    %2898 = vmax.xlane.f32.xlu0 %v2897
    %v2899 = vpop.xlane.xlu0 %2898
    %v2900 = vsel %vm152, %v2862, -inf
    %2901 = vmax.xlane.f32.xlu0 %v2900
    %v2902 = vpop.xlane.xlu0 %2901
    %v2903 = vsel %vm152, %v2863, -inf
    %2904 = vmax.xlane.f32.xlu0 %v2903
    %v2905 = vpop.xlane.xlu0 %2904
    %v2906 = vsel %vm152, %v2864, -inf
    %2907 = vmax.xlane.f32.xlu0 %v2906
    %v2908 = vpop.xlane.xlu0 %2907
    %v2909 = vsel %vm152, %v2865, -inf
    %2910 = vmax.xlane.f32.xlu0 %v2909
    %v2911 = vpop.xlane.xlu0 %2910
    %v2912 = vsel %vm152, %v2866, -inf
    %2913 = vmax.xlane.f32.xlu0 %v2912
    %v2914 = vpop.xlane.xlu0 %2913
    %v2915 = vsel %vm152, %v2867, -inf
    %2916 = vmax.xlane.f32.xlu0 %v2915
    %v2917 = vpop.xlane.xlu0 %2916
    %v2918 = vsel %vm152, %v2868, -inf
    %2919 = vmax.xlane.f32.xlu0 %v2918
    %v2920 = vpop.xlane.xlu0 %2919
    %v2921 = vsel %vm152, %v2869, -inf
    %2922 = vmax.xlane.f32.xlu0 %v2921
    %v2923 = vpop.xlane.xlu0 %2922
    %v2924 = vld [vmem:[%s8] sm:$0xff]
    %v2925 = vld [vmem:[%s8 + $0x8] sm:$0xff]
    %v2926 = vld [vmem:[%s8 + $0x10] sm:$0xff]
    %v2927 = vld [vmem:[%s8 + $0x18] sm:$0xff]
    %v2928 = vld [vmem:[%s8 + $0x20] sm:$0xff]
    %v2929 = vld [vmem:[%s8 + $0x28] sm:$0xff]
    %v2930 = vld [vmem:[%s8 + $0x30] sm:$0xff]
    %v2931 = vld [vmem:[%s8 + $0x38] sm:$0xff]
    %v2932 = vld [vmem:[%s8 + $0x40] sm:$0xff]
    %v2933 = vld [vmem:[%s8 + $0x48] sm:$0xff]
    %v2934 = vld [vmem:[%s8 + $0x50] sm:$0xff]
    %v2935 = vld [vmem:[%s8 + $0x58] sm:$0xff]
    %v2936 = vld [vmem:[%s8 + $0x60] sm:$0xff]
    %v2937 = vld [vmem:[%s8 + $0x68] sm:$0xff]
    %v2938 = vld [vmem:[%s8 + $0x70] sm:$0xff]
    %v2939 = vld [vmem:[%s8 + $0x78] sm:$0xff]
    %v2940 = vld [vmem:[%s8 + $0x80] sm:$0xff]
    %v2941 = vld [vmem:[%s8 + $0x88] sm:$0xff]
    %v2942 = vmul.f32 %v2924, %v2872
    %v2943 = vmul.f32 %v2925, %v2875
    %v2944 = vmul.f32 %v2926, %v2878
    %v2945 = vmul.f32 %v2927, %v2881
    %v2946 = vmul.f32 %v2928, %v2884
    %v2947 = vmul.f32 %v2929, %v2887
    %v2948 = vmul.f32 %v2930, %v2890
    %v2949 = vmul.f32 %v2931, %v2893
    %v2950 = vmul.f32 %v2932, %v2896
    %v2951 = vmul.f32 %v2933, %v2899
    %v2952 = vmul.f32 %v2934, %v2902
    %v2953 = vmul.f32 %v2935, %v2905
    %v2954 = vmul.f32 %v2936, %v2908
    %v2955 = vmul.f32 %v2937, %v2911
    %v2956 = vmul.f32 %v2938, %v2914
    %v2957 = vmul.f32 %v2939, %v2917
    %v2958 = vmul.f32 %v2940, %v2920
    %v2959 = vmul.f32 %v2941, %v2923
    %vm2960 = vcmask 15360
    %v2961 = vsel %vm2960, %v2942, 0.0
    %v2962 = vsel %vm2960, %v2943, 0.0
    %v2963 = vadd.f32 %v2961, %v2962
    %v2964 = vsel %vm2960, %v2944, 0.0
    %v2965 = vadd.f32 %v2963, %v2964
    %v2966 = vsel %vm2960, %v2945, 0.0
    %v2967 = vadd.f32 %v2965, %v2966
    %v2968 = vsel %vm2960, %v2946, 0.0
    %v2969 = vadd.f32 %v2967, %v2968
    %v2970 = vsel %vm2960, %v2947, 0.0
    %v2971 = vadd.f32 %v2969, %v2970
    %v2972 = vsel %vm2960, %v2948, 0.0
    %v2973 = vadd.f32 %v2971, %v2972
    %v2974 = vsel %vm2960, %v2949, 0.0
    %v2975 = vadd.f32 %v2973, %v2974
    %v2976 = vsel %vm2960, %v2950, 0.0
    %v2977 = vadd.f32 %v2975, %v2976
    %v2978 = vsel %vm2960, %v2951, 0.0
    %v2979 = vadd.f32 %v2977, %v2978
    %v2980 = vsel %vm2960, %v2952, 0.0
    %v2981 = vadd.f32 %v2979, %v2980
    %v2982 = vsel %vm2960, %v2953, 0.0
    %v2983 = vadd.f32 %v2981, %v2982
    %v2984 = vsel %vm2960, %v2954, 0.0
    %v2985 = vadd.f32 %v2983, %v2984
    %v2986 = vsel %vm2960, %v2955, 0.0
    %v2987 = vadd.f32 %v2985, %v2986
    %v2988 = vsel %vm2960, %v2956, 0.0
    %v2989 = vadd.f32 %v2987, %v2988
    %v2990 = vsel %vm2960, %v2957, 0.0
    %v2991 = vadd.f32 %v2989, %v2990
    %v2992 = vsel %vm2960, %v2958, 0.0
    %v2993 = vadd.f32 %v2991, %v2992
    %v2994 = vsel %vm2960, %v2959, 0.0
    %v2995 = vadd.f32 %v2993, %v2994
    %v2996 = vrot.slane %v2995, 4
    %v2997 = vadd.f32 %v2995, %v2996
    %v2998 = vrot.slane %v2997, 2
    %v2999 = vadd.f32 %v2997, %v2998
    %v3000 = vrot.slane %v2999, 1
    %v3001 = vadd.f32 %v2999, %v3000
    %3003 = vset.pattern.permute.xlu0 0
    %3004 = vperm.xlu0 %3003, %v35
    %v3005 = vpop.permute.xlu0 %3004
    %v3007 = vadd.f32 %v3001, %v3005
    %vm3008 = vcmask 9217
    %3009 = vst.msk [vmem:[#allocation3 - $0x1] sm:$0x2] %vm3008, %v3007
    // Predicated region
    $region38: #{tpu_custom_call.1} parent=1 // pred_check
      _
    $region39: #{tpu_custom_call.1} parent=1 // pred_check_branch
      %3011 = sbr.rel (0) target = $region41
    $region40: #{tpu_custom_call.1} parent=1 // pred_region
      %s3013 = ssub.s32 16, 16
      %3014 = vsyncadd [#allocation4], %s3013
      %s3016 = sshll.u32 [#allocation3], 4
      %s3017 = int_to_ptr.vmem [resolvable:$true] %s3016
      %3019 = dma.vmem_to_hbm [thread:$0]  %s3017, 16, %s9, [#allocation4]
    $region41: #{tpu_custom_call.1} parent=1 // pred_fallthru
      _
    // Predicated region
    $region42: #{tpu_custom_call.1} parent=1 // pred_check
      _
    $region43: #{tpu_custom_call.1} parent=1 // pred_check_branch
      %3021 = sbr.rel (0) target = $region45
    $region44: #{tpu_custom_call.1} parent=1 // pred_region
      %3022 = dma.done [#allocation4], 16
    $region45: #{tpu_custom_call.1} parent=1 // pred_fallthru
      _
    %3023 = vsyncpa [#allocation4], 1

</llo_original>
